<compile_context>
chip_gen: v5e
topology: v5e:2x2
jax: 0.10.0
libtpu: 0.0.40
codegen_flags: <defaults>
</compile_context>

<pallas_src>
import jax
import jax.numpy as jnp
from jax.experimental import pallas as pl
from jax.experimental.pallas import tpu as pltpu


# --------------------------------------------------------------------------------------
# Fused kernel: LightAttention (conv + attention/max pooling) + MLP head.
# Grid iterates over batch blocks; each step processes Bt batch elements.
# --------------------------------------------------------------------------------------
def _fused_kernel(x_ref, wc_ref, bc_ref,
                  w1_ref, b1_ref, bns_ref, bnb_ref, wo_ref, bo_ref,
                  wf1_ref, bf1_ref, wf2_ref, bf2_ref, wf3_ref, bf3_ref,
                  out_ref, xp_s):
    Bt, L, E = x_ref.shape
    K, _, E2 = wc_ref.shape            # E2 == 2*E  (feature ++ attention channels)
    pad = K // 2
    M = Bt * L

    # ---- zero-padded sequence block built in VMEM (replaces host-side jnp.pad) ----
    xp_s[...] = jnp.zeros_like(xp_s)
    xp_s[:, pad:pad + L, :] = x_ref[...].astype(jnp.float32)

    # ---- both Conv1d's as K shifted [Bt*L, E] @ [E, 2E] matmuls (static unrolled taps) ----
    acc = jnp.broadcast_to(bc_ref[...], (M, E2)).astype(jnp.float32)
    for t in range(K):
        xs = xp_s[:, t:t + L, :].reshape(M, E)
        acc = acc + jnp.dot(xs, wc_ref[t], preferred_element_type=jnp.float32)
    acc = acc.reshape(Bt, L, E2)
    feat = acc[:, :, :E]               # nn.Dropout(conv_dropout) is identity at inference
    attn = acc[:, :, E:]

    # ---- softmax over the sequence axis + attention / max pooling ----
    m = jnp.max(attn, axis=1, keepdims=True)
    p = jnp.exp(attn - m)
    inv = pl.reciprocal(jnp.sum(p, axis=1, keepdims=True), approx=True)
    sm = p * inv
    o1 = jnp.sum(feat * sm, axis=1)                      # [Bt, E]
    o2 = jnp.max(feat, axis=1)                           # [Bt, E]
    pooled = jnp.concatenate([o1, o2], axis=-1)          # [Bt, 2E]

    # ---- MLP head (all weights VMEM-resident) ----
    h = jnp.dot(pooled, w1_ref[...], preferred_element_type=jnp.float32) + b1_ref[...]
    # nn.Dropout is identity at inference.
    h = jnp.maximum(h, 0.0)                              # ReLU
    h = h * bns_ref[...] + bnb_ref[...]                  # BatchNorm1d (eval, folded)
    la = jnp.dot(h, wo_ref[...], preferred_element_type=jnp.float32) + bo_ref[...]
    # Flatten is a no-op on [Bt, output_LA].
    h = jnp.dot(la, wf1_ref[...], preferred_element_type=jnp.float32) + bf1_ref[...]
    h = jnp.where(h > 0, h, 0.1 * h)                     # LeakyReLU(0.1)
    h = jnp.dot(h, wf2_ref[...], preferred_element_type=jnp.float32) + bf2_ref[...]
    h = jnp.where(h > 0, h, 0.1 * h)                     # LeakyReLU(0.1)
    h = jnp.dot(h, wf3_ref[...], preferred_element_type=jnp.float32) + bf3_ref[...]
    out_ref[...] = h.astype(out_ref.dtype)


def la_mlp_pred_forward_impl(x, p, block_b=8):
    B, L, E = x.shape
    K, E_in, E2 = p["wc"].shape
    assert E_in == E and E2 == 2 * E, "conv weight layout must be [K, E, 2E]"
    assert K % 2 == 1, "kernel_size must be odd (padding=K//2 keeps sequence length)"
    assert E % 128 == 0, "embeddings_dim must be a multiple of 128 (TPU lane width)"
    out_dim = p["wf3"].shape[1]

    Bt = min(B, block_b)
    nb = -(-B // Bt)
    Bp = nb * Bt
    if Bp != B:                                # rare glue: pad batch to a multiple of Bt
        x = jnp.pad(x, ((0, Bp - B), (0, 0), (0, 0)))

    pad = K // 2
    Lp = L + 2 * pad

    weight_args = (p["wc"], p["bc"], p["w1"], p["b1"], p["bns"], p["bnb"],
                   p["wo"], p["bo"], p["wf1"], p["bf1"], p["wf2"], p["bf2"],
                   p["wf3"], p["bf3"])

    def _const_spec(a):                        # full-array block, constant index_map ->
        n = a.ndim                             # weights stay resident, no re-DMA per step
        return pl.BlockSpec(a.shape, lambda b, _n=n: (0,) * _n)

    out = pl.pallas_call(
        _fused_kernel,
        out_shape=jax.ShapeDtypeStruct((Bp, out_dim), jnp.float32),
        grid_spec=pltpu.PrefetchScalarGridSpec(
            num_scalar_prefetch=0,
            grid=(nb,),
            in_specs=[pl.BlockSpec((Bt, L, E), lambda b: (b, 0, 0))]
                     + [_const_spec(a) for a in weight_args],
            out_specs=pl.BlockSpec((Bt, out_dim), lambda b: (b, 0)),
            scratch_shapes=[pltpu.VMEM((Bt, Lp, E), jnp.float32)],
        ),
        compiler_params=pltpu.CompilerParams(
            dimension_semantics=("parallel",)),   # disjoint output blocks -> legal; 2 TCs on v7x
    )(x, *weight_args)
    return out[:B]


la_mlp_pred_forward = jax.jit(la_mlp_pred_forward_impl, static_argnames=("block_b",))


# --------------------------------------------------------------------------------------
# Deterministic parameter init (PyTorch-default-style uniform(+-1/sqrt(fan_in))).
# Feature/attention conv weights and biases are stored pre-concatenated ([K, E, 2E], [1, 2E]).
# --------------------------------------------------------------------------------------
def init_params(key, E, output_LA, output_dim, K):
    ks = jax.random.split(key, 14)

    def unif(k, shape, fan_in):
        b = 1.0 / float(fan_in) ** 0.5
        return jax.random.uniform(k, shape, jnp.float32, -b, b)

    p = {}
    wf = unif(ks[0], (K, E, E), E * K)
    bf = unif(ks[1], (1, E), E * K)
    wa = unif(ks[2], (K, E, E), E * K)
    ba = unif(ks[3], (1, E), E * K)
    p["wc"] = jnp.concatenate([wf, wa], axis=-1)     # [K, E, 2E]
    p["bc"] = jnp.concatenate([bf, ba], axis=-1)     # [1, 2E]
    p["w1"] = unif(ks[4], (2 * E, 32), 2 * E)
    p["b1"] = unif(ks[5], (1, 32), 2 * E)
    # BatchNorm1d(32) eval mode with PyTorch default stats, folded to scale/shift.
    eps = 1e-5
    gamma = jnp.ones((1, 32), jnp.float32)
    beta = jnp.zeros((1, 32), jnp.float32)
    rmean = jnp.zeros((1, 32), jnp.float32)
    rvar = jnp.ones((1, 32), jnp.float32)
    p["bns"] = gamma / jnp.sqrt(rvar + eps)
    p["bnb"] = beta - rmean * p["bns"]
    p["wo"] = unif(ks[6], (32, output_LA), 32)
    p["bo"] = unif(ks[7], (1, output_LA), 32)
    p["wf1"] = unif(ks[8], (output_LA, 128), output_LA)
    p["bf1"] = unif(ks[9], (1, 128), output_LA)
    p["wf2"] = unif(ks[10], (128, 64), 128)
    p["bf2"] = unif(ks[11], (1, 64), 128)
    p["wf3"] = unif(ks[12], (64, output_dim), 64)
    p["bf3"] = unif(ks[13], (1, output_dim), 64)
    return p


# --------------------------------------------------------------------------------------
# Pure-JAX reference (same math) for correctness check.
# --------------------------------------------------------------------------------------
def forward_ref(x, p):
    B, L, E = x.shape
    K = p["wc"].shape[0]
    pad = K // 2
    xp = jnp.pad(x, ((0, 0), (pad, pad), (0, 0)))
    acc = jnp.zeros((B, L, 2 * E), jnp.float32) + p["bc"]
    for t in range(K):
        xs = xp[:, t:t + L, :]
        acc = acc + jnp.einsum("ble,eo->blo", xs, p["wc"][t])
    feat = acc[..., :E]
    attn = acc[..., E:]
    sm = jax.nn.softmax(attn, axis=1)
    o1 = jnp.sum(feat * sm, axis=1)
    o2 = jnp.max(feat, axis=1)
    pooled = jnp.concatenate([o1, o2], axis=-1)
    h = pooled @ p["w1"] + p["b1"]
    h = jnp.maximum(h, 0.0)
    h = h * p["bns"] + p["bnb"]
    la = h @ p["wo"] + p["bo"]
    h = la @ p["wf1"] + p["bf1"]
    h = jnp.where(h > 0, h, 0.1 * h)
    h = h @ p["wf2"] + p["bf2"]
    h = jnp.where(h > 0, h, 0.1 * h)
    return h @ p["wf3"] + p["bf3"]


if __name__ == "__main__":
    # Small shapes consistent with the module: embeddings_dim=128, seq=16, batch=2,
    # output_LA=128, output_dim=2, kernel_size=9.
    B, L, E = 2, 16, 128
    OUTPUT_LA, OUTPUT_DIM, K = 128, 2, 9

    key = jax.random.PRNGKey(0)
    kx, kp = jax.random.split(key)
    x = jax.random.normal(kx, (B, L, E), jnp.float32)
    params = init_params(kp, E, OUTPUT_LA, OUTPUT_DIM, K)

    out = la_mlp_pred_forward(x, params)
    out = jax.block_until_ready(out)

    ref = forward_ref(x, params)
    assert out.shape == (B, OUTPUT_DIM), out.shape
    assert jnp.allclose(out, ref, rtol=1e-2, atol=1e-2), (out, ref)
    print("KERNEL_OK")
</pallas_src>

<mosaic_0001>
module attributes {stable_mosaic.version = 11 : i64} {
  func.func @_fused_kernel(%arg0: i32, %arg1: memref<2x16x128xf32, #tpu.memory_space<vmem>>, %arg2: memref<9x128x256xf32, #tpu.memory_space<vmem>>, %arg3: memref<1x256xf32, #tpu.memory_space<vmem>>, %arg4: memref<256x32xf32, #tpu.memory_space<vmem>>, %arg5: memref<1x32xf32, #tpu.memory_space<vmem>>, %arg6: memref<1x32xf32, #tpu.memory_space<vmem>>, %arg7: memref<1x32xf32, #tpu.memory_space<vmem>>, %arg8: memref<32x128xf32, #tpu.memory_space<vmem>>, %arg9: memref<1x128xf32, #tpu.memory_space<vmem>>, %arg10: memref<128x128xf32, #tpu.memory_space<vmem>>, %arg11: memref<1x128xf32, #tpu.memory_space<vmem>>, %arg12: memref<128x64xf32, #tpu.memory_space<vmem>>, %arg13: memref<1x64xf32, #tpu.memory_space<vmem>>, %arg14: memref<64x2xf32, #tpu.memory_space<vmem>>, %arg15: memref<1x2xf32, #tpu.memory_space<vmem>>, %arg16: memref<2x2xf32, #tpu.memory_space<vmem>>, %arg17: memref<2x24x128xf32, #tpu.memory_space<vmem>>) attributes {dimension_semantics = [#tpu.dimension_semantics<parallel>], iteration_bounds = array<i64: 1>, scalar_prefetch = 0 : i64, scratch_operands = 1 : i64, tpu.core_type = #tpu.core_type<tc>, window_params = [{transform_indices = @transform_0, window_bounds = array<i64: 2, 16, 128>}, {pipeline_mode = #tpu.pipeline_mode<synchronous>, transform_indices = @transform_1, window_bounds = array<i64: 9, 128, 256>}, {pipeline_mode = #tpu.pipeline_mode<synchronous>, transform_indices = @transform_2, window_bounds = array<i64: 1, 256>}, {pipeline_mode = #tpu.pipeline_mode<synchronous>, transform_indices = @transform_3, window_bounds = array<i64: 256, 32>}, {pipeline_mode = #tpu.pipeline_mode<synchronous>, transform_indices = @transform_4, window_bounds = array<i64: 1, 32>}, {pipeline_mode = #tpu.pipeline_mode<synchronous>, transform_indices = @transform_5, window_bounds = array<i64: 1, 32>}, {pipeline_mode = #tpu.pipeline_mode<synchronous>, transform_indices = @transform_6, window_bounds = array<i64: 1, 32>}, {pipeline_mode = #tpu.pipeline_mode<synchronous>, transform_indices = @transform_7, window_bounds = array<i64: 32, 128>}, {pipeline_mode = #tpu.pipeline_mode<synchronous>, transform_indices = @transform_8, window_bounds = array<i64: 1, 128>}, {pipeline_mode = #tpu.pipeline_mode<synchronous>, transform_indices = @transform_9, window_bounds = array<i64: 128, 128>}, {pipeline_mode = #tpu.pipeline_mode<synchronous>, transform_indices = @transform_10, window_bounds = array<i64: 1, 128>}, {pipeline_mode = #tpu.pipeline_mode<synchronous>, transform_indices = @transform_11, window_bounds = array<i64: 128, 64>}, {pipeline_mode = #tpu.pipeline_mode<synchronous>, transform_indices = @transform_12, window_bounds = array<i64: 1, 64>}, {pipeline_mode = #tpu.pipeline_mode<synchronous>, transform_indices = @transform_13, window_bounds = array<i64: 64, 2>}, {pipeline_mode = #tpu.pipeline_mode<synchronous>, transform_indices = @transform_14, window_bounds = array<i64: 1, 2>}, {transform_indices = @transform_15, window_bounds = array<i64: 2, 2>}]} {
    %cst = arith.constant 0.000000e+00 : f32
    %0 = vector.broadcast %cst : f32 to vector<2x24x128xf32>
    %c0 = arith.constant 0 : index
    %c0_0 = arith.constant 0 : index
    %c0_1 = arith.constant 0 : index
    %1 = vector.load %arg17[%c0, %c0_0, %c0_1] : memref<2x24x128xf32, #tpu.memory_space<vmem>>, vector<2x24x128xf32>
    tpu.vector_store %arg17[%c0, %c0_0, %c0_1], %0 {strides = array<i32>} : memref<2x24x128xf32, #tpu.memory_space<vmem>>, vector<2x24x128xf32>,
    %c0_2 = arith.constant 0 : index
    %c0_3 = arith.constant 0 : index
    %c0_4 = arith.constant 0 : index
    %2 = vector.load %arg1[%c0_2, %c0_3, %c0_4] : memref<2x16x128xf32, #tpu.memory_space<vmem>>, vector<2x16x128xf32>
    %c0_5 = arith.constant 0 : index
    %c4 = arith.constant 4 : index
    %c0_6 = arith.constant 0 : index
    %3 = vector.load %arg17[%c0_5, %c4, %c0_6] : memref<2x24x128xf32, #tpu.memory_space<vmem>>, vector<2x16x128xf32>
    tpu.vector_store %arg17[%c0_5, %c4, %c0_6], %2 {strides = array<i32>} : memref<2x24x128xf32, #tpu.memory_space<vmem>>, vector<2x16x128xf32>,
    %c0_7 = arith.constant 0 : index
    %c0_8 = arith.constant 0 : index
    %4 = vector.load %arg3[%c0_7, %c0_8] : memref<1x256xf32, #tpu.memory_space<vmem>>, vector<1x256xf32>
    %5 = vector.shape_cast %4 : vector<1x256xf32> to vector<1x256xf32>
    %6 = vector.broadcast %5 : vector<1x256xf32> to vector<32x256xf32>
    %c0_9 = arith.constant 0 : index
    %c0_10 = arith.constant 0 : index
    %c0_11 = arith.constant 0 : index
    %7 = vector.load %arg17[%c0_9, %c0_10, %c0_11] : memref<2x24x128xf32, #tpu.memory_space<vmem>>, vector<2x16x128xf32>
    %8 = vector.shape_cast %7 : vector<2x16x128xf32> to vector<32x128xf32>
    %c0_12 = arith.constant 0 : index
    %c0_13 = arith.constant 0 : index
    %c0_14 = arith.constant 0 : index
    %9 = vector.load %arg2[%c0_12, %c0_13, %c0_14] : memref<9x128x256xf32, #tpu.memory_space<vmem>>, vector<1x128x256xf32>
    %10 = vector.shape_cast %9 : vector<1x128x256xf32> to vector<128x256xf32>
    %cst_15 = arith.constant dense<0.000000e+00> : vector<32x256xf32>
    %11 = tpu.matmul %8, %10, %cst_15 {dimension_numbers = #tpu.dot_dimension_numbers<[1], [0], [0], [1], [0, 0, 1, 1], [], []>} : vector<32x128xf32>, vector<128x256xf32>, vector<32x256xf32> -> vector<32x256xf32>
    %12 = arith.addf %6, %11 : vector<32x256xf32>
    %c0_16 = arith.constant 0 : index
    %c1 = arith.constant 1 : index
    %c0_17 = arith.constant 0 : index
    %13 = vector.load %arg17[%c0_16, %c1, %c0_17] : memref<2x24x128xf32, #tpu.memory_space<vmem>>, vector<2x16x128xf32>
    %14 = vector.shape_cast %13 : vector<2x16x128xf32> to vector<32x128xf32>
    %c1_18 = arith.constant 1 : index
    %c0_19 = arith.constant 0 : index
    %c0_20 = arith.constant 0 : index
    %15 = vector.load %arg2[%c1_18, %c0_19, %c0_20] : memref<9x128x256xf32, #tpu.memory_space<vmem>>, vector<1x128x256xf32>
    %16 = vector.shape_cast %15 : vector<1x128x256xf32> to vector<128x256xf32>
    %cst_21 = arith.constant dense<0.000000e+00> : vector<32x256xf32>
    %17 = tpu.matmul %14, %16, %cst_21 {dimension_numbers = #tpu.dot_dimension_numbers<[1], [0], [0], [1], [0, 0, 1, 1], [], []>} : vector<32x128xf32>, vector<128x256xf32>, vector<32x256xf32> -> vector<32x256xf32>
    %18 = arith.addf %12, %17 : vector<32x256xf32>
    %c0_22 = arith.constant 0 : index
    %c2 = arith.constant 2 : index
    %c0_23 = arith.constant 0 : index
    %19 = vector.load %arg17[%c0_22, %c2, %c0_23] : memref<2x24x128xf32, #tpu.memory_space<vmem>>, vector<2x16x128xf32>
    %20 = vector.shape_cast %19 : vector<2x16x128xf32> to vector<32x128xf32>
    %c2_24 = arith.constant 2 : index
    %c0_25 = arith.constant 0 : index
    %c0_26 = arith.constant 0 : index
    %21 = vector.load %arg2[%c2_24, %c0_25, %c0_26] : memref<9x128x256xf32, #tpu.memory_space<vmem>>, vector<1x128x256xf32>
    %22 = vector.shape_cast %21 : vector<1x128x256xf32> to vector<128x256xf32>
    %cst_27 = arith.constant dense<0.000000e+00> : vector<32x256xf32>
    %23 = tpu.matmul %20, %22, %cst_27 {dimension_numbers = #tpu.dot_dimension_numbers<[1], [0], [0], [1], [0, 0, 1, 1], [], []>} : vector<32x128xf32>, vector<128x256xf32>, vector<32x256xf32> -> vector<32x256xf32>
    %24 = arith.addf %18, %23 : vector<32x256xf32>
    %c0_28 = arith.constant 0 : index
    %c3 = arith.constant 3 : index
    %c0_29 = arith.constant 0 : index
    %25 = vector.load %arg17[%c0_28, %c3, %c0_29] : memref<2x24x128xf32, #tpu.memory_space<vmem>>, vector<2x16x128xf32>
    %26 = vector.shape_cast %25 : vector<2x16x128xf32> to vector<32x128xf32>
    %c3_30 = arith.constant 3 : index
    %c0_31 = arith.constant 0 : index
    %c0_32 = arith.constant 0 : index
    %27 = vector.load %arg2[%c3_30, %c0_31, %c0_32] : memref<9x128x256xf32, #tpu.memory_space<vmem>>, vector<1x128x256xf32>
    %28 = vector.shape_cast %27 : vector<1x128x256xf32> to vector<128x256xf32>
    %cst_33 = arith.constant dense<0.000000e+00> : vector<32x256xf32>
    %29 = tpu.matmul %26, %28, %cst_33 {dimension_numbers = #tpu.dot_dimension_numbers<[1], [0], [0], [1], [0, 0, 1, 1], [], []>} : vector<32x128xf32>, vector<128x256xf32>, vector<32x256xf32> -> vector<32x256xf32>
    %30 = arith.addf %24, %29 : vector<32x256xf32>
    %c0_34 = arith.constant 0 : index
    %c4_35 = arith.constant 4 : index
    %c0_36 = arith.constant 0 : index
    %31 = vector.load %arg17[%c0_34, %c4_35, %c0_36] : memref<2x24x128xf32, #tpu.memory_space<vmem>>, vector<2x16x128xf32>
    %32 = vector.shape_cast %31 : vector<2x16x128xf32> to vector<32x128xf32>
    %c4_37 = arith.constant 4 : index
    %c0_38 = arith.constant 0 : index
    %c0_39 = arith.constant 0 : index
    %33 = vector.load %arg2[%c4_37, %c0_38, %c0_39] : memref<9x128x256xf32, #tpu.memory_space<vmem>>, vector<1x128x256xf32>
    %34 = vector.shape_cast %33 : vector<1x128x256xf32> to vector<128x256xf32>
    %cst_40 = arith.constant dense<0.000000e+00> : vector<32x256xf32>
    %35 = tpu.matmul %32, %34, %cst_40 {dimension_numbers = #tpu.dot_dimension_numbers<[1], [0], [0], [1], [0, 0, 1, 1], [], []>} : vector<32x128xf32>, vector<128x256xf32>, vector<32x256xf32> -> vector<32x256xf32>
    %36 = arith.addf %30, %35 : vector<32x256xf32>
    %c0_41 = arith.constant 0 : index
    %c5 = arith.constant 5 : index
    %c0_42 = arith.constant 0 : index
    %37 = vector.load %arg17[%c0_41, %c5, %c0_42] : memref<2x24x128xf32, #tpu.memory_space<vmem>>, vector<2x16x128xf32>
    %38 = vector.shape_cast %37 : vector<2x16x128xf32> to vector<32x128xf32>
    %c5_43 = arith.constant 5 : index
    %c0_44 = arith.constant 0 : index
    %c0_45 = arith.constant 0 : index
    %39 = vector.load %arg2[%c5_43, %c0_44, %c0_45] : memref<9x128x256xf32, #tpu.memory_space<vmem>>, vector<1x128x256xf32>
    %40 = vector.shape_cast %39 : vector<1x128x256xf32> to vector<128x256xf32>
    %cst_46 = arith.constant dense<0.000000e+00> : vector<32x256xf32>
    %41 = tpu.matmul %38, %40, %cst_46 {dimension_numbers = #tpu.dot_dimension_numbers<[1], [0], [0], [1], [0, 0, 1, 1], [], []>} : vector<32x128xf32>, vector<128x256xf32>, vector<32x256xf32> -> vector<32x256xf32>
    %42 = arith.addf %36, %41 : vector<32x256xf32>
    %c0_47 = arith.constant 0 : index
    %c6 = arith.constant 6 : index
    %c0_48 = arith.constant 0 : index
    %43 = vector.load %arg17[%c0_47, %c6, %c0_48] : memref<2x24x128xf32, #tpu.memory_space<vmem>>, vector<2x16x128xf32>
    %44 = vector.shape_cast %43 : vector<2x16x128xf32> to vector<32x128xf32>
    %c6_49 = arith.constant 6 : index
    %c0_50 = arith.constant 0 : index
    %c0_51 = arith.constant 0 : index
    %45 = vector.load %arg2[%c6_49, %c0_50, %c0_51] : memref<9x128x256xf32, #tpu.memory_space<vmem>>, vector<1x128x256xf32>
    %46 = vector.shape_cast %45 : vector<1x128x256xf32> to vector<128x256xf32>
    %cst_52 = arith.constant dense<0.000000e+00> : vector<32x256xf32>
    %47 = tpu.matmul %44, %46, %cst_52 {dimension_numbers = #tpu.dot_dimension_numbers<[1], [0], [0], [1], [0, 0, 1, 1], [], []>} : vector<32x128xf32>, vector<128x256xf32>, vector<32x256xf32> -> vector<32x256xf32>
    %48 = arith.addf %42, %47 : vector<32x256xf32>
    %c0_53 = arith.constant 0 : index
    %c7 = arith.constant 7 : index
    %c0_54 = arith.constant 0 : index
    %49 = vector.load %arg17[%c0_53, %c7, %c0_54] : memref<2x24x128xf32, #tpu.memory_space<vmem>>, vector<2x16x128xf32>
    %50 = vector.shape_cast %49 : vector<2x16x128xf32> to vector<32x128xf32>
    %c7_55 = arith.constant 7 : index
    %c0_56 = arith.constant 0 : index
    %c0_57 = arith.constant 0 : index
    %51 = vector.load %arg2[%c7_55, %c0_56, %c0_57] : memref<9x128x256xf32, #tpu.memory_space<vmem>>, vector<1x128x256xf32>
    %52 = vector.shape_cast %51 : vector<1x128x256xf32> to vector<128x256xf32>
    %cst_58 = arith.constant dense<0.000000e+00> : vector<32x256xf32>
    %53 = tpu.matmul %50, %52, %cst_58 {dimension_numbers = #tpu.dot_dimension_numbers<[1], [0], [0], [1], [0, 0, 1, 1], [], []>} : vector<32x128xf32>, vector<128x256xf32>, vector<32x256xf32> -> vector<32x256xf32>
    %54 = arith.addf %48, %53 : vector<32x256xf32>
    %c0_59 = arith.constant 0 : index
    %c8 = arith.constant 8 : index
    %c0_60 = arith.constant 0 : index
    %55 = vector.load %arg17[%c0_59, %c8, %c0_60] : memref<2x24x128xf32, #tpu.memory_space<vmem>>, vector<2x16x128xf32>
    %56 = vector.shape_cast %55 : vector<2x16x128xf32> to vector<32x128xf32>
    %c8_61 = arith.constant 8 : index
    %c0_62 = arith.constant 0 : index
    %c0_63 = arith.constant 0 : index
    %57 = vector.load %arg2[%c8_61, %c0_62, %c0_63] : memref<9x128x256xf32, #tpu.memory_space<vmem>>, vector<1x128x256xf32>
    %58 = vector.shape_cast %57 : vector<1x128x256xf32> to vector<128x256xf32>
    %cst_64 = arith.constant dense<0.000000e+00> : vector<32x256xf32>
    %59 = tpu.matmul %56, %58, %cst_64 {dimension_numbers = #tpu.dot_dimension_numbers<[1], [0], [0], [1], [0, 0, 1, 1], [], []>} : vector<32x128xf32>, vector<128x256xf32>, vector<32x256xf32> -> vector<32x256xf32>
    %60 = arith.addf %54, %59 : vector<32x256xf32>
    %61 = vector.shape_cast %60 : vector<32x256xf32> to vector<2x16x256xf32>
    %62 = vector.extract_strided_slice %61 {offsets = [0, 0, 0], sizes = [2, 16, 128], strides = [1, 1, 1]} : vector<2x16x256xf32> to vector<2x16x128xf32>
    %63 = vector.extract_strided_slice %61 {offsets = [0, 0, 128], sizes = [2, 16, 128], strides = [1, 1, 1]} : vector<2x16x256xf32> to vector<2x16x128xf32>
    %cst_65 = arith.constant dense<0xFF800000> : vector<2x128xf32>
    %64 = vector.multi_reduction <maximumf>, %63, %cst_65 [1] : vector<2x16x128xf32> to vector<2x128xf32>
    %65 = vector.shape_cast %64 : vector<2x128xf32> to vector<2x1x128xf32>
    %66 = vector.broadcast %65 : vector<2x1x128xf32> to vector<2x16x128xf32>
    %67 = arith.subf %63, %66 : vector<2x16x128xf32>
    %68 = math.exp %67 : vector<2x16x128xf32>
    %cst_66 = arith.constant dense<0.000000e+00> : vector<2x128xf32>
    %69 = vector.multi_reduction <add>, %68, %cst_66 [1] : vector<2x16x128xf32> to vector<2x128xf32>
    %70 = vector.shape_cast %69 : vector<2x128xf32> to vector<2x1x128xf32>
    %71 = tpu.reciprocal %70 {approx = true} : vector<2x1x128xf32> -> vector<2x1x128xf32>
    %72 = vector.broadcast %71 : vector<2x1x128xf32> to vector<2x16x128xf32>
    %73 = arith.mulf %68, %72 : vector<2x16x128xf32>
    %74 = arith.mulf %62, %73 : vector<2x16x128xf32>
    %cst_67 = arith.constant dense<0.000000e+00> : vector<2x128xf32>
    %75 = vector.multi_reduction <add>, %74, %cst_67 [1] : vector<2x16x128xf32> to vector<2x128xf32>
    %cst_68 = arith.constant dense<0xFF800000> : vector<2x128xf32>
    %76 = vector.multi_reduction <maximumf>, %62, %cst_68 [1] : vector<2x16x128xf32> to vector<2x128xf32>
    %77 = tpu.concatenate %75, %76 in 1 : vector<2x128xf32>, vector<2x128xf32> -> vector<2x256xf32>
    %c0_69 = arith.constant 0 : index
    %c0_70 = arith.constant 0 : index
    %78 = vector.load %arg4[%c0_69, %c0_70] : memref<256x32xf32, #tpu.memory_space<vmem>>, vector<256x32xf32>
    %cst_71 = arith.constant dense<0.000000e+00> : vector<2x32xf32>
    %79 = tpu.matmul %77, %78, %cst_71 {dimension_numbers = #tpu.dot_dimension_numbers<[1], [0], [0], [1], [0, 0, 1, 1], [], []>} : vector<2x256xf32>, vector<256x32xf32>, vector<2x32xf32> -> vector<2x32xf32>
    %c0_72 = arith.constant 0 : index
    %c0_73 = arith.constant 0 : index
    %80 = vector.load %arg5[%c0_72, %c0_73] : memref<1x32xf32, #tpu.memory_space<vmem>>, vector<1x32xf32>
    %81 = vector.broadcast %80 : vector<1x32xf32> to vector<2x32xf32>
    %82 = arith.addf %79, %81 : vector<2x32xf32>
    %cst_74 = arith.constant 0.000000e+00 : f32
    %83 = vector.broadcast %cst_74 : f32 to vector<2x32xf32>
    %84 = arith.maximumf %82, %83 : vector<2x32xf32>
    %c0_75 = arith.constant 0 : index
    %c0_76 = arith.constant 0 : index
    %85 = vector.load %arg6[%c0_75, %c0_76] : memref<1x32xf32, #tpu.memory_space<vmem>>, vector<1x32xf32>
    %86 = vector.broadcast %85 : vector<1x32xf32> to vector<2x32xf32>
    %87 = arith.mulf %84, %86 : vector<2x32xf32>
    %c0_77 = arith.constant 0 : index
    %c0_78 = arith.constant 0 : index
    %88 = vector.load %arg7[%c0_77, %c0_78] : memref<1x32xf32, #tpu.memory_space<vmem>>, vector<1x32xf32>
    %89 = vector.broadcast %88 : vector<1x32xf32> to vector<2x32xf32>
    %90 = arith.addf %87, %89 : vector<2x32xf32>
    %c0_79 = arith.constant 0 : index
    %c0_80 = arith.constant 0 : index
    %91 = vector.load %arg8[%c0_79, %c0_80] : memref<32x128xf32, #tpu.memory_space<vmem>>, vector<32x128xf32>
    %cst_81 = arith.constant dense<0.000000e+00> : vector<2x128xf32>
    %92 = tpu.matmul %90, %91, %cst_81 {dimension_numbers = #tpu.dot_dimension_numbers<[1], [0], [0], [1], [0, 0, 1, 1], [], []>} : vector<2x32xf32>, vector<32x128xf32>, vector<2x128xf32> -> vector<2x128xf32>
    %c0_82 = arith.constant 0 : index
    %c0_83 = arith.constant 0 : index
    %93 = vector.load %arg9[%c0_82, %c0_83] : memref<1x128xf32, #tpu.memory_space<vmem>>, vector<1x128xf32>
    %94 = vector.broadcast %93 : vector<1x128xf32> to vector<2x128xf32>
    %95 = arith.addf %92, %94 : vector<2x128xf32>
    %c0_84 = arith.constant 0 : index
    %c0_85 = arith.constant 0 : index
    %96 = vector.load %arg10[%c0_84, %c0_85] : memref<128x128xf32, #tpu.memory_space<vmem>>, vector<128x128xf32>
    %cst_86 = arith.constant dense<0.000000e+00> : vector<2x128xf32>
    %97 = tpu.matmul %95, %96, %cst_86 {dimension_numbers = #tpu.dot_dimension_numbers<[1], [0], [0], [1], [0, 0, 1, 1], [], []>} : vector<2x128xf32>, vector<128x128xf32>, vector<2x128xf32> -> vector<2x128xf32>
    %c0_87 = arith.constant 0 : index
    %c0_88 = arith.constant 0 : index
    %98 = vector.load %arg11[%c0_87, %c0_88] : memref<1x128xf32, #tpu.memory_space<vmem>>, vector<1x128xf32>
    %99 = vector.broadcast %98 : vector<1x128xf32> to vector<2x128xf32>
    %100 = arith.addf %97, %99 : vector<2x128xf32>
    %cst_89 = arith.constant 0.000000e+00 : f32
    %101 = vector.broadcast %cst_89 : f32 to vector<2x128xf32>
    %102 = arith.cmpf ogt, %100, %101 : vector<2x128xf32>
    %cst_90 = arith.constant 1.000000e-01 : f32
    %103 = vector.broadcast %cst_90 : f32 to vector<2x128xf32>
    %104 = arith.mulf %103, %100 : vector<2x128xf32>
    %105 = arith.select %102, %100, %104 : vector<2x128xi1>, vector<2x128xf32>
    %c0_91 = arith.constant 0 : index
    %c0_92 = arith.constant 0 : index
    %106 = vector.load %arg12[%c0_91, %c0_92] : memref<128x64xf32, #tpu.memory_space<vmem>>, vector<128x64xf32>
    %cst_93 = arith.constant dense<0.000000e+00> : vector<2x64xf32>
    %107 = tpu.matmul %105, %106, %cst_93 {dimension_numbers = #tpu.dot_dimension_numbers<[1], [0], [0], [1], [0, 0, 1, 1], [], []>} : vector<2x128xf32>, vector<128x64xf32>, vector<2x64xf32> -> vector<2x64xf32>
    %c0_94 = arith.constant 0 : index
    %c0_95 = arith.constant 0 : index
    %108 = vector.load %arg13[%c0_94, %c0_95] : memref<1x64xf32, #tpu.memory_space<vmem>>, vector<1x64xf32>
    %109 = vector.broadcast %108 : vector<1x64xf32> to vector<2x64xf32>
    %110 = arith.addf %107, %109 : vector<2x64xf32>
    %cst_96 = arith.constant 0.000000e+00 : f32
    %111 = vector.broadcast %cst_96 : f32 to vector<2x64xf32>
    %112 = arith.cmpf ogt, %110, %111 : vector<2x64xf32>
    %cst_97 = arith.constant 1.000000e-01 : f32
    %113 = vector.broadcast %cst_97 : f32 to vector<2x64xf32>
    %114 = arith.mulf %113, %110 : vector<2x64xf32>
    %115 = arith.select %112, %110, %114 : vector<2x64xi1>, vector<2x64xf32>
    %c0_98 = arith.constant 0 : index
    %c0_99 = arith.constant 0 : index
    %116 = vector.load %arg14[%c0_98, %c0_99] : memref<64x2xf32, #tpu.memory_space<vmem>>, vector<64x2xf32>
    %cst_100 = arith.constant dense<0.000000e+00> : vector<2x2xf32>
    %117 = tpu.matmul %115, %116, %cst_100 {dimension_numbers = #tpu.dot_dimension_numbers<[1], [0], [0], [1], [0, 0, 1, 1], [], []>} : vector<2x64xf32>, vector<64x2xf32>, vector<2x2xf32> -> vector<2x2xf32>
    %c0_101 = arith.constant 0 : index
    %c0_102 = arith.constant 0 : index
    %118 = vector.load %arg15[%c0_101, %c0_102] : memref<1x2xf32, #tpu.memory_space<vmem>>, vector<1x2xf32>
    %119 = vector.broadcast %118 : vector<1x2xf32> to vector<2x2xf32>
    %120 = arith.addf %117, %119 : vector<2x2xf32>
    %c0_103 = arith.constant 0 : index
    %c0_104 = arith.constant 0 : index
    %121 = vector.load %arg16[%c0_103, %c0_104] : memref<2x2xf32, #tpu.memory_space<vmem>>, vector<2x2xf32>
    tpu.vector_store %arg16[%c0_103, %c0_104], %120 {strides = array<i32>} : memref<2x2xf32, #tpu.memory_space<vmem>>, vector<2x2xf32>,
    return
  }
  func.func @transform_0(%arg0: i32) -> (i32, i32, i32) {
    %c0_i32 = arith.constant 0 : i32
    %c0_i32_0 = arith.constant 0 : i32
    %c0_i32_1 = arith.constant 0 : i32
    return %arg0, %c0_i32, %c0_i32_0 : i32, i32, i32
  }
  func.func @transform_1(%arg0: i32) -> (i32, i32, i32) {
    %c0_i32 = arith.constant 0 : i32
    %c0_i32_0 = arith.constant 0 : i32
    %c0_i32_1 = arith.constant 0 : i32
    %c0_i32_2 = arith.constant 0 : i32
    return %c0_i32, %c0_i32_0, %c0_i32_1 : i32, i32, i32
  }
  func.func @transform_2(%arg0: i32) -> (i32, i32) {
    %c0_i32 = arith.constant 0 : i32
    %c0_i32_0 = arith.constant 0 : i32
    %c0_i32_1 = arith.constant 0 : i32
    return %c0_i32, %c0_i32_0 : i32, i32
  }
  func.func @transform_3(%arg0: i32) -> (i32, i32) {
    %c0_i32 = arith.constant 0 : i32
    %c0_i32_0 = arith.constant 0 : i32
    %c0_i32_1 = arith.constant 0 : i32
    return %c0_i32, %c0_i32_0 : i32, i32
  }
  func.func @transform_4(%arg0: i32) -> (i32, i32) {
    %c0_i32 = arith.constant 0 : i32
    %c0_i32_0 = arith.constant 0 : i32
    %c0_i32_1 = arith.constant 0 : i32
    return %c0_i32, %c0_i32_0 : i32, i32
  }
  func.func @transform_5(%arg0: i32) -> (i32, i32) {
    %c0_i32 = arith.constant 0 : i32
    %c0_i32_0 = arith.constant 0 : i32
    %c0_i32_1 = arith.constant 0 : i32
    return %c0_i32, %c0_i32_0 : i32, i32
  }
  func.func @transform_6(%arg0: i32) -> (i32, i32) {
    %c0_i32 = arith.constant 0 : i32
    %c0_i32_0 = arith.constant 0 : i32
    %c0_i32_1 = arith.constant 0 : i32
    return %c0_i32, %c0_i32_0 : i32, i32
  }
  func.func @transform_7(%arg0: i32) -> (i32, i32) {
    %c0_i32 = arith.constant 0 : i32
    %c0_i32_0 = arith.constant 0 : i32
    %c0_i32_1 = arith.constant 0 : i32
    return %c0_i32, %c0_i32_0 : i32, i32
  }
  func.func @transform_8(%arg0: i32) -> (i32, i32) {
    %c0_i32 = arith.constant 0 : i32
    %c0_i32_0 = arith.constant 0 : i32
    %c0_i32_1 = arith.constant 0 : i32
    return %c0_i32, %c0_i32_0 : i32, i32
  }
  func.func @transform_9(%arg0: i32) -> (i32, i32) {
    %c0_i32 = arith.constant 0 : i32
    %c0_i32_0 = arith.constant 0 : i32
    %c0_i32_1 = arith.constant 0 : i32
    return %c0_i32, %c0_i32_0 : i32, i32
  }
  func.func @transform_10(%arg0: i32) -> (i32, i32) {
    %c0_i32 = arith.constant 0 : i32
    %c0_i32_0 = arith.constant 0 : i32
    %c0_i32_1 = arith.constant 0 : i32
    return %c0_i32, %c0_i32_0 : i32, i32
  }
  func.func @transform_11(%arg0: i32) -> (i32, i32) {
    %c0_i32 = arith.constant 0 : i32
    %c0_i32_0 = arith.constant 0 : i32
    %c0_i32_1 = arith.constant 0 : i32
    return %c0_i32, %c0_i32_0 : i32, i32
  }
  func.func @transform_12(%arg0: i32) -> (i32, i32) {
    %c0_i32 = arith.constant 0 : i32
    %c0_i32_0 = arith.constant 0 : i32
    %c0_i32_1 = arith.constant 0 : i32
    return %c0_i32, %c0_i32_0 : i32, i32
  }
  func.func @transform_13(%arg0: i32) -> (i32, i32) {
    %c0_i32 = arith.constant 0 : i32
    %c0_i32_0 = arith.constant 0 : i32
    %c0_i32_1 = arith.constant 0 : i32
    return %c0_i32, %c0_i32_0 : i32, i32
  }
  func.func @transform_14(%arg0: i32) -> (i32, i32) {
    %c0_i32 = arith.constant 0 : i32
    %c0_i32_0 = arith.constant 0 : i32
    %c0_i32_1 = arith.constant 0 : i32
    return %c0_i32, %c0_i32_0 : i32, i32
  }
  func.func @transform_15(%arg0: i32) -> (i32, i32) {
    %c0_i32 = arith.constant 0 : i32
    %c0_i32_0 = arith.constant 0 : i32
    return %arg0, %c0_i32 : i32, i32
  }
}

</mosaic_0001>

<llo_original>
// kernel: la_mlp_pred_forward_impl.1
$region0: #{la_mlp_pred_forward_impl.1}
  #allocation0 [shape = 'u32[]', space=smem, size = 0x4, offset = 0x4, fixed_abs, tag = 'smem constant byte address 0x4 - core index']
  #allocation1 [shape = 'u32[72,128]{1,0:T(1,128)}', space=vmem, size = 0x9000, scoped, tag = 'internal scratch']
  #allocation2 [shape = 'f32[2,24,128]{2,1,0:T(8,128)}', space=vmem, size = 0x6000, scoped, tag = 'scratch operand']
  %s0 = inlined_call_operand.hbm [shape: f32[2,16,128], index: 0, kind: input, shape index: {}]
  %s1 = inlined_call_operand.hbm [shape: f32[9,128,256], index: 1, kind: input, shape index: {}]
  %s2 = inlined_call_operand.hbm [shape: f32[1,256], index: 2, kind: input, shape index: {}]
  %s3 = inlined_call_operand.vmem [shape: f32[256,32], index: 3, kind: input, shape index: {}]
  %s4 = inlined_call_operand.hbm [shape: f32[1,32], index: 4, kind: input, shape index: {}]
  %s5 = inlined_call_operand.hbm [shape: f32[1,32], index: 5, kind: input, shape index: {}]
  %s6 = inlined_call_operand.hbm [shape: f32[1,32], index: 6, kind: input, shape index: {}]
  %s7 = inlined_call_operand.hbm [shape: f32[32,128], index: 7, kind: input, shape index: {}]
  %s8 = inlined_call_operand.hbm [shape: f32[1,128], index: 8, kind: input, shape index: {}]
  %s9 = inlined_call_operand.hbm [shape: f32[128,128], index: 9, kind: input, shape index: {}]
  %s10 = inlined_call_operand.hbm [shape: f32[1,128], index: 10, kind: input, shape index: {}]
  %s11 = inlined_call_operand.vmem [shape: f32[128,64], index: 11, kind: input, shape index: {}]
  %s12 = inlined_call_operand.hbm [shape: f32[1,64], index: 12, kind: input, shape index: {}]
  %s13 = inlined_call_operand.vmem [shape: f32[64,2], index: 13, kind: input, shape index: {}]
  %s14 = inlined_call_operand.hbm [shape: f32[1,2], index: 14, kind: input, shape index: {}]
  %s15 = inlined_call_operand.hbm [shape: f32[2,2], index: 15, kind: output, shape index: {}]
  %s16 = sld [smem:[#allocation0]]
  $region118: #{la_mlp_pred_forward_impl.1} parent=0
    _
  %s18 = ssub.s32 1, %s16
  %s19 = scalar_select 0, %s18, %s16
  $region1: #{la_mlp_pred_forward_impl.1} parent=0
    #allocation3 [shape = 'u8[16384]{0}', space=vmem, size = 0x4000, scoped, tag = 'input window, operand 0, single buffered']
    #allocation4 [shape = 's32[1]{0}', space=sflag, size = 0x4, scoped, tag = 'scoped memory for la_mlp_pred_forward_impl.1']
    #allocation5 [shape = 's32[1]{0}', space=sflag, size = 0x4, scoped, tag = 'scoped memory for la_mlp_pred_forward_impl.1']
    #allocation6 [shape = 'u8[1179648]{0}', space=vmem, size = 0x120000, scoped, tag = 'input window, operand 1, single buffered']
    #allocation7 [shape = 's32[1]{0}', space=sflag, size = 0x4, scoped, tag = 'scoped memory for la_mlp_pred_forward_impl.1']
    #allocation8 [shape = 'u8[1024]{0}', space=vmem, size = 0x400, scoped, tag = 'input window, operand 2, single buffered']
    #allocation9 [shape = 'u8[512]{0}', space=vmem, size = 0x400, scoped, tag = 'input window, operand 4, single buffered']
    #allocation10 [shape = 's32[1]{0}', space=sflag, size = 0x4, scoped, tag = 'scoped memory for la_mlp_pred_forward_impl.1']
    #allocation11 [shape = 'u8[512]{0}', space=vmem, size = 0x400, scoped, tag = 'input window, operand 5, single buffered']
    #allocation12 [shape = 'u8[512]{0}', space=vmem, size = 0x400, scoped, tag = 'input window, operand 6, single buffered']
    #allocation13 [shape = 's32[1]{0}', space=sflag, size = 0x4, scoped, tag = 'scoped memory for la_mlp_pred_forward_impl.1']
    #allocation14 [shape = 'u8[16384]{0}', space=vmem, size = 0x4000, scoped, tag = 'input window, operand 7, single buffered']
    #allocation15 [shape = 'u8[512]{0}', space=vmem, size = 0x400, scoped, tag = 'input window, operand 8, single buffered']
    #allocation16 [shape = 's32[1]{0}', space=sflag, size = 0x4, scoped, tag = 'scoped memory for la_mlp_pred_forward_impl.1']
    #allocation17 [shape = 'u8[65536]{0}', space=vmem, size = 0x10000, scoped, tag = 'input window, operand 9, single buffered']
    #allocation18 [shape = 'u8[512]{0}', space=vmem, size = 0x400, scoped, tag = 'input window, operand 10, single buffered']
    #allocation19 [shape = 's32[1]{0}', space=sflag, size = 0x4, scoped, tag = 'scoped memory for la_mlp_pred_forward_impl.1']
    #allocation20 [shape = 'u8[512]{0}', space=vmem, size = 0x400, scoped, tag = 'input window, operand 12, single buffered']
    #allocation21 [shape = 'u8[512]{0}', space=vmem, size = 0x400, scoped, tag = 'input window, operand 14, single buffered']
    #allocation22 [shape = 's32[1]{0}', space=sflag, size = 0x4, scoped, tag = 'scoped memory for la_mlp_pred_forward_impl.1']
    #allocation23 [shape = 'u8[1024]{0}', space=vmem, size = 0x400, scoped, tag = 'output window, operand 0, single buffered']
    %20 = vsyncpa [#allocation4], 0
    %21 = vsyncpa [#allocation7], 0
    %22 = vsyncpa [#allocation10], 0
    %23 = vsyncpa [#allocation13], 0
    %24 = vsyncpa [#allocation16], 0
    %25 = vsyncpa [#allocation19], 0
    %26 = vsyncpa [#allocation22], 0
    %27 = vsyncpa [#allocation5], 0
    // Predicated region
    $region2: #{la_mlp_pred_forward_impl.1} parent=1 // pred_check
      _
    $region3: #{la_mlp_pred_forward_impl.1} parent=1 // pred_check_branch
      %29 = sbr.rel (0) target = $region5
    $region4: #{la_mlp_pred_forward_impl.1} parent=1 // pred_region
      %31 = vsyncadd [#allocation4], 0
      %s32 = sshll.u32 %s0, 4
      %s33 = int_to_ptr.hbm [resolvable:$true] %s32
      %s34 = sshll.u32 [#allocation3], 4
      %s35 = int_to_ptr.vmem [resolvable:$true] %s34
      %40 = dma.hbm_to_vmem [thread:$0]  %s33, 512, %s35, [#allocation4], 128, 128, 8
    $region5: #{la_mlp_pred_forward_impl.1} parent=1 // pred_fallthru
      _
    // Predicated region
    $region6: #{la_mlp_pred_forward_impl.1} parent=1 // pred_check
      _
    $region7: #{la_mlp_pred_forward_impl.1} parent=1 // pred_check_branch
      %42 = sbr.rel (0) target = $region9
    $region8: #{la_mlp_pred_forward_impl.1} parent=1 // pred_region
      %44 = vsyncadd [#allocation7], 0
      %s45 = sshll.u32 %s1, 4
      %s46 = int_to_ptr.hbm [resolvable:$true] %s45
      %s47 = sshll.u32 [#allocation6], 4
      %s48 = int_to_ptr.vmem [resolvable:$true] %s47
      %53 = dma.hbm_to_vmem [thread:$0]  %s46, 36864, %s48, [#allocation7], 256, 256, 16
    $region9: #{la_mlp_pred_forward_impl.1} parent=1 // pred_fallthru
      _
    // Predicated region
    $region10: #{la_mlp_pred_forward_impl.1} parent=1 // pred_check
      _
    $region11: #{la_mlp_pred_forward_impl.1} parent=1 // pred_check_branch
      %55 = sbr.rel (0) target = $region13
    $region12: #{la_mlp_pred_forward_impl.1} parent=1 // pred_region
      %57 = vsyncadd [#allocation7], 0
      %s59 = sshll.u32 %s2, 4
      %s60 = int_to_ptr.hbm [resolvable:$true] %s59
      %s61 = sshll.u32 [#allocation8], 4
      %s62 = int_to_ptr.vmem [resolvable:$true] %s61
      %64 = dma.hbm_to_vmem [thread:$0]  %s60, 32, %s62, [#allocation7]
    $region13: #{la_mlp_pred_forward_impl.1} parent=1 // pred_fallthru
      _
    // Predicated region
    $region14: #{la_mlp_pred_forward_impl.1} parent=1 // pred_check
      _
    $region15: #{la_mlp_pred_forward_impl.1} parent=1 // pred_check_branch
      %66 = sbr.rel (0) target = $region17
    $region16: #{la_mlp_pred_forward_impl.1} parent=1 // pred_region
      _
    $region17: #{la_mlp_pred_forward_impl.1} parent=1 // pred_fallthru
      _
    // Predicated region
    $region18: #{la_mlp_pred_forward_impl.1} parent=1 // pred_check
      _
    $region19: #{la_mlp_pred_forward_impl.1} parent=1 // pred_check_branch
      %68 = sbr.rel (0) target = $region21
    $region20: #{la_mlp_pred_forward_impl.1} parent=1 // pred_region
      %70 = vsyncadd [#allocation10], 0
      %s72 = sshll.u32 %s4, 4
      %s73 = int_to_ptr.hbm [resolvable:$true] %s72
      %s74 = sshll.u32 [#allocation9], 4
      %s75 = int_to_ptr.vmem [resolvable:$true] %s74
      %77 = dma.hbm_to_vmem [thread:$0]  %s73, 16, %s75, [#allocation10]
    $region21: #{la_mlp_pred_forward_impl.1} parent=1 // pred_fallthru
      _
    // Predicated region
    $region22: #{la_mlp_pred_forward_impl.1} parent=1 // pred_check
      _
    $region23: #{la_mlp_pred_forward_impl.1} parent=1 // pred_check_branch
      %79 = sbr.rel (0) target = $region25
    $region24: #{la_mlp_pred_forward_impl.1} parent=1 // pred_region
      %81 = vsyncadd [#allocation10], 0
      %s83 = sshll.u32 %s5, 4
      %s84 = int_to_ptr.hbm [resolvable:$true] %s83
      %s85 = sshll.u32 [#allocation11], 4
      %s86 = int_to_ptr.vmem [resolvable:$true] %s85
      %88 = dma.hbm_to_vmem [thread:$0]  %s84, 16, %s86, [#allocation10]
    $region25: #{la_mlp_pred_forward_impl.1} parent=1 // pred_fallthru
      _
    // Predicated region
    $region26: #{la_mlp_pred_forward_impl.1} parent=1 // pred_check
      _
    $region27: #{la_mlp_pred_forward_impl.1} parent=1 // pred_check_branch
      %90 = sbr.rel (0) target = $region29
    $region28: #{la_mlp_pred_forward_impl.1} parent=1 // pred_region
      %92 = vsyncadd [#allocation13], 0
      %s94 = sshll.u32 %s6, 4
      %s95 = int_to_ptr.hbm [resolvable:$true] %s94
      %s96 = sshll.u32 [#allocation12], 4
      %s97 = int_to_ptr.vmem [resolvable:$true] %s96
      %99 = dma.hbm_to_vmem [thread:$0]  %s95, 16, %s97, [#allocation13]
    $region29: #{la_mlp_pred_forward_impl.1} parent=1 // pred_fallthru
      _
    // Predicated region
    $region30: #{la_mlp_pred_forward_impl.1} parent=1 // pred_check
      _
    $region31: #{la_mlp_pred_forward_impl.1} parent=1 // pred_check_branch
      %101 = sbr.rel (0) target = $region33
    $region32: #{la_mlp_pred_forward_impl.1} parent=1 // pred_region
      %103 = vsyncadd [#allocation13], 0
      %s104 = sshll.u32 %s7, 4
      %s105 = int_to_ptr.hbm [resolvable:$true] %s104
      %s106 = sshll.u32 [#allocation14], 4
      %s107 = int_to_ptr.vmem [resolvable:$true] %s106
      %112 = dma.hbm_to_vmem [thread:$0]  %s105, 512, %s107, [#allocation13], 128, 128, 8
    $region33: #{la_mlp_pred_forward_impl.1} parent=1 // pred_fallthru
      _
    // Predicated region
    $region34: #{la_mlp_pred_forward_impl.1} parent=1 // pred_check
      _
    $region35: #{la_mlp_pred_forward_impl.1} parent=1 // pred_check_branch
      %114 = sbr.rel (0) target = $region37
    $region36: #{la_mlp_pred_forward_impl.1} parent=1 // pred_region
      %116 = vsyncadd [#allocation16], 0
      %s118 = sshll.u32 %s8, 4
      %s119 = int_to_ptr.hbm [resolvable:$true] %s118
      %s120 = sshll.u32 [#allocation15], 4
      %s121 = int_to_ptr.vmem [resolvable:$true] %s120
      %123 = dma.hbm_to_vmem [thread:$0]  %s119, 16, %s121, [#allocation16]
    $region37: #{la_mlp_pred_forward_impl.1} parent=1 // pred_fallthru
      _
    // Predicated region
    $region38: #{la_mlp_pred_forward_impl.1} parent=1 // pred_check
      _
    $region39: #{la_mlp_pred_forward_impl.1} parent=1 // pred_check_branch
      %125 = sbr.rel (0) target = $region41
    $region40: #{la_mlp_pred_forward_impl.1} parent=1 // pred_region
      %127 = vsyncadd [#allocation16], 0
      %s128 = sshll.u32 %s9, 4
      %s129 = int_to_ptr.hbm [resolvable:$true] %s128
      %s130 = sshll.u32 [#allocation17], 4
      %s131 = int_to_ptr.vmem [resolvable:$true] %s130
      %136 = dma.hbm_to_vmem [thread:$0]  %s129, 2048, %s131, [#allocation16], 128, 128, 8
    $region41: #{la_mlp_pred_forward_impl.1} parent=1 // pred_fallthru
      _
    // Predicated region
    $region42: #{la_mlp_pred_forward_impl.1} parent=1 // pred_check
      _
    $region43: #{la_mlp_pred_forward_impl.1} parent=1 // pred_check_branch
      %138 = sbr.rel (0) target = $region45
    $region44: #{la_mlp_pred_forward_impl.1} parent=1 // pred_region
      %140 = vsyncadd [#allocation19], 0
      %s142 = sshll.u32 %s10, 4
      %s143 = int_to_ptr.hbm [resolvable:$true] %s142
      %s144 = sshll.u32 [#allocation18], 4
      %s145 = int_to_ptr.vmem [resolvable:$true] %s144
      %147 = dma.hbm_to_vmem [thread:$0]  %s143, 16, %s145, [#allocation19]
    $region45: #{la_mlp_pred_forward_impl.1} parent=1 // pred_fallthru
      _
    // Predicated region
    $region46: #{la_mlp_pred_forward_impl.1} parent=1 // pred_check
      _
    $region47: #{la_mlp_pred_forward_impl.1} parent=1 // pred_check_branch
      %149 = sbr.rel (0) target = $region49
    $region48: #{la_mlp_pred_forward_impl.1} parent=1 // pred_region
      _
    $region49: #{la_mlp_pred_forward_impl.1} parent=1 // pred_fallthru
      _
    // Predicated region
    $region50: #{la_mlp_pred_forward_impl.1} parent=1 // pred_check
      _
    $region51: #{la_mlp_pred_forward_impl.1} parent=1 // pred_check_branch
      %151 = sbr.rel (0) target = $region53
    $region52: #{la_mlp_pred_forward_impl.1} parent=1 // pred_region
      %153 = vsyncadd [#allocation19], 0
      %s155 = sshll.u32 %s12, 4
      %s156 = int_to_ptr.hbm [resolvable:$true] %s155
      %s157 = sshll.u32 [#allocation20], 4
      %s158 = int_to_ptr.vmem [resolvable:$true] %s157
      %160 = dma.hbm_to_vmem [thread:$0]  %s156, 16, %s158, [#allocation19]
    $region53: #{la_mlp_pred_forward_impl.1} parent=1 // pred_fallthru
      _
    // Predicated region
    $region54: #{la_mlp_pred_forward_impl.1} parent=1 // pred_check
      _
    $region55: #{la_mlp_pred_forward_impl.1} parent=1 // pred_check_branch
      %162 = sbr.rel (0) target = $region57
    $region56: #{la_mlp_pred_forward_impl.1} parent=1 // pred_region
      _
    $region57: #{la_mlp_pred_forward_impl.1} parent=1 // pred_fallthru
      _
    // Predicated region
    $region58: #{la_mlp_pred_forward_impl.1} parent=1 // pred_check
      _
    $region59: #{la_mlp_pred_forward_impl.1} parent=1 // pred_check_branch
      %164 = sbr.rel (0) target = $region61
    $region60: #{la_mlp_pred_forward_impl.1} parent=1 // pred_region
      %166 = vsyncadd [#allocation22], 0
      %s168 = sshll.u32 %s14, 4
      %s169 = int_to_ptr.hbm [resolvable:$true] %s168
      %s170 = sshll.u32 [#allocation21], 4
      %s171 = int_to_ptr.vmem [resolvable:$true] %s170
      %173 = dma.hbm_to_vmem [thread:$0]  %s169, 16, %s171, [#allocation22]
    $region61: #{la_mlp_pred_forward_impl.1} parent=1 // pred_fallthru
      _
    // Predicated region
    $region62: #{la_mlp_pred_forward_impl.1} parent=1 // pred_check
      _
    $region63: #{la_mlp_pred_forward_impl.1} parent=1 // pred_check_branch
      %175 = sbr.rel (0) target = $region65
    $region64: #{la_mlp_pred_forward_impl.1} parent=1 // pred_region
      %177 = dma.done [#allocation4], 512
    $region65: #{la_mlp_pred_forward_impl.1} parent=1 // pred_fallthru
      _
    // Predicated region
    $region66: #{la_mlp_pred_forward_impl.1} parent=1 // pred_check
      _
    $region67: #{la_mlp_pred_forward_impl.1} parent=1 // pred_check_branch
      %179 = sbr.rel (0) target = $region69
    $region68: #{la_mlp_pred_forward_impl.1} parent=1 // pred_region
      %181 = dma.done [#allocation7], 36864
    $region69: #{la_mlp_pred_forward_impl.1} parent=1 // pred_fallthru
      _
    // Predicated region
    $region70: #{la_mlp_pred_forward_impl.1} parent=1 // pred_check
      _
    $region71: #{la_mlp_pred_forward_impl.1} parent=1 // pred_check_branch
      %183 = sbr.rel (0) target = $region73
    $region72: #{la_mlp_pred_forward_impl.1} parent=1 // pred_region
      %185 = dma.done [#allocation7], 32
    $region73: #{la_mlp_pred_forward_impl.1} parent=1 // pred_fallthru
      _
    // Predicated region
    $region74: #{la_mlp_pred_forward_impl.1} parent=1 // pred_check
      _
    $region75: #{la_mlp_pred_forward_impl.1} parent=1 // pred_check_branch
      %187 = sbr.rel (0) target = $region77
    $region76: #{la_mlp_pred_forward_impl.1} parent=1 // pred_region
      %189 = dma.done [#allocation10], 16
    $region77: #{la_mlp_pred_forward_impl.1} parent=1 // pred_fallthru
      _
    // Predicated region
    $region78: #{la_mlp_pred_forward_impl.1} parent=1 // pred_check
      _
    $region79: #{la_mlp_pred_forward_impl.1} parent=1 // pred_check_branch
      %191 = sbr.rel (0) target = $region81
    $region80: #{la_mlp_pred_forward_impl.1} parent=1 // pred_region
      %193 = dma.done [#allocation10], 16
    $region81: #{la_mlp_pred_forward_impl.1} parent=1 // pred_fallthru
      _
    // Predicated region
    $region82: #{la_mlp_pred_forward_impl.1} parent=1 // pred_check
      _
    $region83: #{la_mlp_pred_forward_impl.1} parent=1 // pred_check_branch
      %195 = sbr.rel (0) target = $region85
    $region84: #{la_mlp_pred_forward_impl.1} parent=1 // pred_region
      %197 = dma.done [#allocation13], 16
    $region85: #{la_mlp_pred_forward_impl.1} parent=1 // pred_fallthru
      _
    // Predicated region
    $region86: #{la_mlp_pred_forward_impl.1} parent=1 // pred_check
      _
    $region87: #{la_mlp_pred_forward_impl.1} parent=1 // pred_check_branch
      %199 = sbr.rel (0) target = $region89
    $region88: #{la_mlp_pred_forward_impl.1} parent=1 // pred_region
      %201 = dma.done [#allocation13], 512
    $region89: #{la_mlp_pred_forward_impl.1} parent=1 // pred_fallthru
      _
    // Predicated region
    $region90: #{la_mlp_pred_forward_impl.1} parent=1 // pred_check
      _
    $region91: #{la_mlp_pred_forward_impl.1} parent=1 // pred_check_branch
      %203 = sbr.rel (0) target = $region93
    $region92: #{la_mlp_pred_forward_impl.1} parent=1 // pred_region
      %205 = dma.done [#allocation16], 16
    $region93: #{la_mlp_pred_forward_impl.1} parent=1 // pred_fallthru
      _
    // Predicated region
    $region94: #{la_mlp_pred_forward_impl.1} parent=1 // pred_check
      _
    $region95: #{la_mlp_pred_forward_impl.1} parent=1 // pred_check_branch
      %207 = sbr.rel (0) target = $region97
    $region96: #{la_mlp_pred_forward_impl.1} parent=1 // pred_region
      %209 = dma.done [#allocation16], 2048
    $region97: #{la_mlp_pred_forward_impl.1} parent=1 // pred_fallthru
      _
    // Predicated region
    $region98: #{la_mlp_pred_forward_impl.1} parent=1 // pred_check
      _
    $region99: #{la_mlp_pred_forward_impl.1} parent=1 // pred_check_branch
      %211 = sbr.rel (0) target = $region101
    $region100: #{la_mlp_pred_forward_impl.1} parent=1 // pred_region
      %213 = dma.done [#allocation19], 16
    $region101: #{la_mlp_pred_forward_impl.1} parent=1 // pred_fallthru
      _
    // Predicated region
    $region102: #{la_mlp_pred_forward_impl.1} parent=1 // pred_check
      _
    $region103: #{la_mlp_pred_forward_impl.1} parent=1 // pred_check_branch
      %215 = sbr.rel (0) target = $region105
    $region104: #{la_mlp_pred_forward_impl.1} parent=1 // pred_region
      %217 = dma.done [#allocation19], 16
    $region105: #{la_mlp_pred_forward_impl.1} parent=1 // pred_fallthru
      _
    // Predicated region
    $region106: #{la_mlp_pred_forward_impl.1} parent=1 // pred_check
      _
    $region107: #{la_mlp_pred_forward_impl.1} parent=1 // pred_check_branch
      %219 = sbr.rel (0) target = $region109
    $region108: #{la_mlp_pred_forward_impl.1} parent=1 // pred_region
      %221 = dma.done [#allocation22], 16
    $region109: #{la_mlp_pred_forward_impl.1} parent=1 // pred_fallthru
      _
    %222 = vst [vmem:[#allocation2] sm:$0xff] 0.0
    %223 = vst [vmem:[#allocation2 + $0x8] sm:$0xff] 0.0
    %224 = vst [vmem:[#allocation2 + $0x10] sm:$0xff] 0.0
    %225 = vst [vmem:[#allocation2 + $0x18] sm:$0xff] 0.0
    %226 = vst [vmem:[#allocation2 + $0x20] sm:$0xff] 0.0
    %227 = vst [vmem:[#allocation2 + $0x28] sm:$0xff] 0.0
    %v228 = vld [vmem:[#allocation3] sm:$0xff]
    %v229 = vld [vmem:[#allocation3 + $0x8] sm:$0xff]
    %v230 = vld [vmem:[#allocation3 + $0x10] sm:$0xff]
    %v231 = vld [vmem:[#allocation3 + $0x18] sm:$0xff]
    %232 = vst [vmem:[#allocation2 + $0x4] sm:$0xff] %v228
    %233 = vst [vmem:[#allocation2 + $0xc] sm:$0xff] %v229
    %234 = vst [vmem:[#allocation2 + $0x1c] sm:$0xff] %v230
    %235 = vst [vmem:[#allocation2 + $0x24] sm:$0xff] %v231
    %v236 = vld [vmem:[#allocation8] sm:$0x3]
    %v238 = vperm.slane %v236, 0
    %v239 = vperm.slane %v236, 1
    %v242 = vld [vmem:[#allocation2] sm:$0xff]
    %v243 = vld [vmem:[#allocation2 + $0x8] sm:$0xff]
    %v244 = vld [vmem:[#allocation2 + $0x18] sm:$0xff]
    %v245 = vld [vmem:[#allocation2 + $0x20] sm:$0xff]
    %v246 = vld [vmem:[#allocation6] sm:$0xff]
    %v247 = vld [vmem:[#allocation6 + $0x8] sm:$0xff]
    %v248 = vld [vmem:[#allocation6 + $0x10] sm:$0xff]
    %v249 = vld [vmem:[#allocation6 + $0x18] sm:$0xff]
    %v250 = vld [vmem:[#allocation6 + $0x20] sm:$0xff]
    %v251 = vld [vmem:[#allocation6 + $0x28] sm:$0xff]
    %v252 = vld [vmem:[#allocation6 + $0x30] sm:$0xff]
    %v253 = vld [vmem:[#allocation6 + $0x38] sm:$0xff]
    %v254 = vld [vmem:[#allocation6 + $0x40] sm:$0xff]
    %v255 = vld [vmem:[#allocation6 + $0x48] sm:$0xff]
    %v256 = vld [vmem:[#allocation6 + $0x50] sm:$0xff]
    %v257 = vld [vmem:[#allocation6 + $0x58] sm:$0xff]
    %v258 = vld [vmem:[#allocation6 + $0x60] sm:$0xff]
    %v259 = vld [vmem:[#allocation6 + $0x68] sm:$0xff]
    %v260 = vld [vmem:[#allocation6 + $0x70] sm:$0xff]
    %v261 = vld [vmem:[#allocation6 + $0x78] sm:$0xff]
    %v262 = vld [vmem:[#allocation6 + $0x80] sm:$0xff]
    %v263 = vld [vmem:[#allocation6 + $0x88] sm:$0xff]
    %v264 = vld [vmem:[#allocation6 + $0x90] sm:$0xff]
    %v265 = vld [vmem:[#allocation6 + $0x98] sm:$0xff]
    %v266 = vld [vmem:[#allocation6 + $0xa0] sm:$0xff]
    %v267 = vld [vmem:[#allocation6 + $0xa8] sm:$0xff]
    %v268 = vld [vmem:[#allocation6 + $0xb0] sm:$0xff]
    %v269 = vld [vmem:[#allocation6 + $0xb8] sm:$0xff]
    %v270 = vld [vmem:[#allocation6 + $0xc0] sm:$0xff]
    %v271 = vld [vmem:[#allocation6 + $0xc8] sm:$0xff]
    %v272 = vld [vmem:[#allocation6 + $0xd0] sm:$0xff]
    %v273 = vld [vmem:[#allocation6 + $0xd8] sm:$0xff]
    %v274 = vld [vmem:[#allocation6 + $0xe0] sm:$0xff]
    %v275 = vld [vmem:[#allocation6 + $0xe8] sm:$0xff]
    %v276 = vld [vmem:[#allocation6 + $0xf0] sm:$0xff]
    %v277 = vld [vmem:[#allocation6 + $0xf8] sm:$0xff]
    %278 = vmatpush.msra.mxu0 %v276
    %279 = vmatpush.msra.mxu0 %v274
    %280 = vmatpush.msra.mxu0 %v272
    %281 = vmatpush.msra.mxu0 %v270
    %282 = vmatpush.msra.mxu0 %v268
    %283 = vmatpush.msra.mxu0 %v266
    %284 = vmatpush.msra.mxu0 %v264
    %285 = vmatpush.msra.mxu0 %v262
    %286 = vmatpush.msra.mxu0 %v260
    %287 = vmatpush.msra.mxu0 %v258
    %288 = vmatpush.msra.mxu0 %v256
    %289 = vmatpush.msra.mxu0 %v254
    %290 = vmatpush.msra.mxu0 %v252
    %291 = vmatpush.msra.mxu0 %v250
    %292 = vmatpush.msra.mxu0 %v248
    %293 = vmatpush.msra.mxu0 %v246
    %294 = vmatmul.f32.gmra.mxu0 %v242
    %v295 = vpop.f32.mrf.mxu0
    %v296 = vadd.f32 0.0, %v295
    %297 = vmatmul.f32.gmra.mxu0 %v243
    %v298 = vpop.f32.mrf.mxu0
    %v299 = vadd.f32 0.0, %v298
    %300 = vmatmul.f32.gmra.mxu0 %v244
    %v301 = vpop.f32.mrf.mxu0
    %v302 = vadd.f32 0.0, %v301
    %303 = vmatmul.f32.gmra.mxu0 %v245
    %v304 = vpop.f32.mrf.mxu0
    %v305 = vadd.f32 0.0, %v304
    %306 = vdwg.mxu0
    %307 = vmatpush.msra.mxu0 %v277
    %308 = vmatpush.msra.mxu0 %v275
    %309 = vmatpush.msra.mxu0 %v273
    %310 = vmatpush.msra.mxu0 %v271
    %311 = vmatpush.msra.mxu0 %v269
    %312 = vmatpush.msra.mxu0 %v267
    %313 = vmatpush.msra.mxu0 %v265
    %314 = vmatpush.msra.mxu0 %v263
    %315 = vmatpush.msra.mxu0 %v261
    %316 = vmatpush.msra.mxu0 %v259
    %317 = vmatpush.msra.mxu0 %v257
    %318 = vmatpush.msra.mxu0 %v255
    %319 = vmatpush.msra.mxu0 %v253
    %320 = vmatpush.msra.mxu0 %v251
    %321 = vmatpush.msra.mxu0 %v249
    %322 = vmatpush.msra.mxu0 %v247
    %323 = vmatmul.f32.gmra.mxu0 %v242
    %v324 = vpop.f32.mrf.mxu0
    %v325 = vadd.f32 0.0, %v324
    %326 = vmatmul.f32.gmra.mxu0 %v243
    %v327 = vpop.f32.mrf.mxu0
    %v328 = vadd.f32 0.0, %v327
    %329 = vmatmul.f32.gmra.mxu0 %v244
    %v330 = vpop.f32.mrf.mxu0
    %v331 = vadd.f32 0.0, %v330
    %332 = vmatmul.f32.gmra.mxu0 %v245
    %v333 = vpop.f32.mrf.mxu0
    %v334 = vadd.f32 0.0, %v333
    %335 = vdwg.mxu0
    %v336 = vadd.f32 %v238, %v296
    %v337 = vadd.f32 %v239, %v325
    %v338 = vadd.f32 %v238, %v299
    %v339 = vadd.f32 %v239, %v328
    %v340 = vadd.f32 %v238, %v302
    %v341 = vadd.f32 %v239, %v331
    %v342 = vadd.f32 %v238, %v305
    %v343 = vadd.f32 %v239, %v334
    %v344 = vld [vmem:[#allocation2 + $0x1] sm:$0xff]
    %v345 = vld [vmem:[#allocation2 + $0x9] sm:$0xff]
    %v346 = vld [vmem:[#allocation2 + $0x19] sm:$0xff]
    %v347 = vld [vmem:[#allocation2 + $0x21] sm:$0xff]
    %s348 = scalar_lea.vmem [#allocation6], 256
    %v349 = vld [vmem:[%s348] sm:$0xff]
    %v350 = vld [vmem:[%s348 + $0x8] sm:$0xff]
    %v351 = vld [vmem:[%s348 + $0x10] sm:$0xff]
    %v352 = vld [vmem:[%s348 + $0x18] sm:$0xff]
    %v353 = vld [vmem:[%s348 + $0x20] sm:$0xff]
    %v354 = vld [vmem:[%s348 + $0x28] sm:$0xff]
    %v355 = vld [vmem:[%s348 + $0x30] sm:$0xff]
    %v356 = vld [vmem:[%s348 + $0x38] sm:$0xff]
    %v357 = vld [vmem:[%s348 + $0x40] sm:$0xff]
    %v358 = vld [vmem:[%s348 + $0x48] sm:$0xff]
    %v359 = vld [vmem:[%s348 + $0x50] sm:$0xff]
    %v360 = vld [vmem:[%s348 + $0x58] sm:$0xff]
    %v361 = vld [vmem:[%s348 + $0x60] sm:$0xff]
    %v362 = vld [vmem:[%s348 + $0x68] sm:$0xff]
    %v363 = vld [vmem:[%s348 + $0x70] sm:$0xff]
    %v364 = vld [vmem:[%s348 + $0x78] sm:$0xff]
    %v365 = vld [vmem:[%s348 + $0x80] sm:$0xff]
    %v366 = vld [vmem:[%s348 + $0x88] sm:$0xff]
    %v367 = vld [vmem:[%s348 + $0x90] sm:$0xff]
    %v368 = vld [vmem:[%s348 + $0x98] sm:$0xff]
    %v369 = vld [vmem:[%s348 + $0xa0] sm:$0xff]
    %v370 = vld [vmem:[%s348 + $0xa8] sm:$0xff]
    %v371 = vld [vmem:[%s348 + $0xb0] sm:$0xff]
    %v372 = vld [vmem:[%s348 + $0xb8] sm:$0xff]
    %v373 = vld [vmem:[%s348 + $0xc0] sm:$0xff]
    %v374 = vld [vmem:[%s348 + $0xc8] sm:$0xff]
    %v375 = vld [vmem:[%s348 + $0xd0] sm:$0xff]
    %v376 = vld [vmem:[%s348 + $0xd8] sm:$0xff]
    %v377 = vld [vmem:[%s348 + $0xe0] sm:$0xff]
    %v378 = vld [vmem:[%s348 + $0xe8] sm:$0xff]
    %v379 = vld [vmem:[%s348 + $0xf0] sm:$0xff]
    %v380 = vld [vmem:[%s348 + $0xf8] sm:$0xff]
    %381 = vmatpush.msra.mxu0 %v379
    %382 = vmatpush.msra.mxu0 %v377
    %383 = vmatpush.msra.mxu0 %v375
    %384 = vmatpush.msra.mxu0 %v373
    %385 = vmatpush.msra.mxu0 %v371
    %386 = vmatpush.msra.mxu0 %v369
    %387 = vmatpush.msra.mxu0 %v367
    %388 = vmatpush.msra.mxu0 %v365
    %389 = vmatpush.msra.mxu0 %v363
    %390 = vmatpush.msra.mxu0 %v361
    %391 = vmatpush.msra.mxu0 %v359
    %392 = vmatpush.msra.mxu0 %v357
    %393 = vmatpush.msra.mxu0 %v355
    %394 = vmatpush.msra.mxu0 %v353
    %395 = vmatpush.msra.mxu0 %v351
    %396 = vmatpush.msra.mxu0 %v349
    %397 = vmatmul.f32.gmra.mxu0 %v344
    %v398 = vpop.f32.mrf.mxu0
    %v399 = vadd.f32 0.0, %v398
    %400 = vmatmul.f32.gmra.mxu0 %v345
    %v401 = vpop.f32.mrf.mxu0
    %v402 = vadd.f32 0.0, %v401
    %403 = vmatmul.f32.gmra.mxu0 %v346
    %v404 = vpop.f32.mrf.mxu0
    %v405 = vadd.f32 0.0, %v404
    %406 = vmatmul.f32.gmra.mxu0 %v347
    %v407 = vpop.f32.mrf.mxu0
    %v408 = vadd.f32 0.0, %v407
    %409 = vdwg.mxu0
    %410 = vmatpush.msra.mxu0 %v380
    %411 = vmatpush.msra.mxu0 %v378
    %412 = vmatpush.msra.mxu0 %v376
    %413 = vmatpush.msra.mxu0 %v374
    %414 = vmatpush.msra.mxu0 %v372
    %415 = vmatpush.msra.mxu0 %v370
    %416 = vmatpush.msra.mxu0 %v368
    %417 = vmatpush.msra.mxu0 %v366
    %418 = vmatpush.msra.mxu0 %v364
    %419 = vmatpush.msra.mxu0 %v362
    %420 = vmatpush.msra.mxu0 %v360
    %421 = vmatpush.msra.mxu0 %v358
    %422 = vmatpush.msra.mxu0 %v356
    %423 = vmatpush.msra.mxu0 %v354
    %424 = vmatpush.msra.mxu0 %v352
    %425 = vmatpush.msra.mxu0 %v350
    %426 = vmatmul.f32.gmra.mxu0 %v344
    %v427 = vpop.f32.mrf.mxu0
    %v428 = vadd.f32 0.0, %v427
    %429 = vmatmul.f32.gmra.mxu0 %v345
    %v430 = vpop.f32.mrf.mxu0
    %v431 = vadd.f32 0.0, %v430
    %432 = vmatmul.f32.gmra.mxu0 %v346
    %v433 = vpop.f32.mrf.mxu0
    %v434 = vadd.f32 0.0, %v433
    %435 = vmatmul.f32.gmra.mxu0 %v347
    %v436 = vpop.f32.mrf.mxu0
    %v437 = vadd.f32 0.0, %v436
    %438 = vdwg.mxu0
    %v439 = vadd.f32 %v336, %v399
    %v440 = vadd.f32 %v337, %v428
    %v441 = vadd.f32 %v338, %v402
    %v442 = vadd.f32 %v339, %v431
    %v443 = vadd.f32 %v340, %v405
    %v444 = vadd.f32 %v341, %v434
    %v445 = vadd.f32 %v342, %v408
    %v446 = vadd.f32 %v343, %v437
    %v447 = vld [vmem:[#allocation2 + $0x2] sm:$0xff]
    %v448 = vld [vmem:[#allocation2 + $0xa] sm:$0xff]
    %v449 = vld [vmem:[#allocation2 + $0x1a] sm:$0xff]
    %v450 = vld [vmem:[#allocation2 + $0x22] sm:$0xff]
    %s451 = scalar_lea.vmem [#allocation6], 512
    %v452 = vld [vmem:[%s451] sm:$0xff]
    %v453 = vld [vmem:[%s451 + $0x8] sm:$0xff]
    %v454 = vld [vmem:[%s451 + $0x10] sm:$0xff]
    %v455 = vld [vmem:[%s451 + $0x18] sm:$0xff]
    %v456 = vld [vmem:[%s451 + $0x20] sm:$0xff]
    %v457 = vld [vmem:[%s451 + $0x28] sm:$0xff]
    %v458 = vld [vmem:[%s451 + $0x30] sm:$0xff]
    %v459 = vld [vmem:[%s451 + $0x38] sm:$0xff]
    %v460 = vld [vmem:[%s451 + $0x40] sm:$0xff]
    %v461 = vld [vmem:[%s451 + $0x48] sm:$0xff]
    %v462 = vld [vmem:[%s451 + $0x50] sm:$0xff]
    %v463 = vld [vmem:[%s451 + $0x58] sm:$0xff]
    %v464 = vld [vmem:[%s451 + $0x60] sm:$0xff]
    %v465 = vld [vmem:[%s451 + $0x68] sm:$0xff]
    %v466 = vld [vmem:[%s451 + $0x70] sm:$0xff]
    %v467 = vld [vmem:[%s451 + $0x78] sm:$0xff]
    %v468 = vld [vmem:[%s451 + $0x80] sm:$0xff]
    %v469 = vld [vmem:[%s451 + $0x88] sm:$0xff]
    %v470 = vld [vmem:[%s451 + $0x90] sm:$0xff]
    %v471 = vld [vmem:[%s451 + $0x98] sm:$0xff]
    %v472 = vld [vmem:[%s451 + $0xa0] sm:$0xff]
    %v473 = vld [vmem:[%s451 + $0xa8] sm:$0xff]
    %v474 = vld [vmem:[%s451 + $0xb0] sm:$0xff]
    %v475 = vld [vmem:[%s451 + $0xb8] sm:$0xff]
    %v476 = vld [vmem:[%s451 + $0xc0] sm:$0xff]
    %v477 = vld [vmem:[%s451 + $0xc8] sm:$0xff]
    %v478 = vld [vmem:[%s451 + $0xd0] sm:$0xff]
    %v479 = vld [vmem:[%s451 + $0xd8] sm:$0xff]
    %v480 = vld [vmem:[%s451 + $0xe0] sm:$0xff]
    %v481 = vld [vmem:[%s451 + $0xe8] sm:$0xff]
    %v482 = vld [vmem:[%s451 + $0xf0] sm:$0xff]
    %v483 = vld [vmem:[%s451 + $0xf8] sm:$0xff]
    %484 = vmatpush.msra.mxu0 %v482
    %485 = vmatpush.msra.mxu0 %v480
    %486 = vmatpush.msra.mxu0 %v478
    %487 = vmatpush.msra.mxu0 %v476
    %488 = vmatpush.msra.mxu0 %v474
    %489 = vmatpush.msra.mxu0 %v472
    %490 = vmatpush.msra.mxu0 %v470
    %491 = vmatpush.msra.mxu0 %v468
    %492 = vmatpush.msra.mxu0 %v466
    %493 = vmatpush.msra.mxu0 %v464
    %494 = vmatpush.msra.mxu0 %v462
    %495 = vmatpush.msra.mxu0 %v460
    %496 = vmatpush.msra.mxu0 %v458
    %497 = vmatpush.msra.mxu0 %v456
    %498 = vmatpush.msra.mxu0 %v454
    %499 = vmatpush.msra.mxu0 %v452
    %500 = vmatmul.f32.gmra.mxu0 %v447
    %v501 = vpop.f32.mrf.mxu0
    %v502 = vadd.f32 0.0, %v501
    %503 = vmatmul.f32.gmra.mxu0 %v448
    %v504 = vpop.f32.mrf.mxu0
    %v505 = vadd.f32 0.0, %v504
    %506 = vmatmul.f32.gmra.mxu0 %v449
    %v507 = vpop.f32.mrf.mxu0
    %v508 = vadd.f32 0.0, %v507
    %509 = vmatmul.f32.gmra.mxu0 %v450
    %v510 = vpop.f32.mrf.mxu0
    %v511 = vadd.f32 0.0, %v510
    %512 = vdwg.mxu0
    %513 = vmatpush.msra.mxu0 %v483
    %514 = vmatpush.msra.mxu0 %v481
    %515 = vmatpush.msra.mxu0 %v479
    %516 = vmatpush.msra.mxu0 %v477
    %517 = vmatpush.msra.mxu0 %v475
    %518 = vmatpush.msra.mxu0 %v473
    %519 = vmatpush.msra.mxu0 %v471
    %520 = vmatpush.msra.mxu0 %v469
    %521 = vmatpush.msra.mxu0 %v467
    %522 = vmatpush.msra.mxu0 %v465
    %523 = vmatpush.msra.mxu0 %v463
    %524 = vmatpush.msra.mxu0 %v461
    %525 = vmatpush.msra.mxu0 %v459
    %526 = vmatpush.msra.mxu0 %v457
    %527 = vmatpush.msra.mxu0 %v455
    %528 = vmatpush.msra.mxu0 %v453
    %529 = vmatmul.f32.gmra.mxu0 %v447
    %v530 = vpop.f32.mrf.mxu0
    %v531 = vadd.f32 0.0, %v530
    %532 = vmatmul.f32.gmra.mxu0 %v448
    %v533 = vpop.f32.mrf.mxu0
    %v534 = vadd.f32 0.0, %v533
    %535 = vmatmul.f32.gmra.mxu0 %v449
    %v536 = vpop.f32.mrf.mxu0
    %v537 = vadd.f32 0.0, %v536
    %538 = vmatmul.f32.gmra.mxu0 %v450
    %v539 = vpop.f32.mrf.mxu0
    %v540 = vadd.f32 0.0, %v539
    %541 = vdwg.mxu0
    %v542 = vadd.f32 %v439, %v502
    %v543 = vadd.f32 %v440, %v531
    %v544 = vadd.f32 %v441, %v505
    %v545 = vadd.f32 %v442, %v534
    %v546 = vadd.f32 %v443, %v508
    %v547 = vadd.f32 %v444, %v537
    %v548 = vadd.f32 %v445, %v511
    %v549 = vadd.f32 %v446, %v540
    %v550 = vld [vmem:[#allocation2 + $0x3] sm:$0xff]
    %v551 = vld [vmem:[#allocation2 + $0xb] sm:$0xff]
    %v552 = vld [vmem:[#allocation2 + $0x1b] sm:$0xff]
    %v553 = vld [vmem:[#allocation2 + $0x23] sm:$0xff]
    %s554 = scalar_lea.vmem [#allocation6], 768
    %v555 = vld [vmem:[%s554] sm:$0xff]
    %v556 = vld [vmem:[%s554 + $0x8] sm:$0xff]
    %v557 = vld [vmem:[%s554 + $0x10] sm:$0xff]
    %v558 = vld [vmem:[%s554 + $0x18] sm:$0xff]
    %v559 = vld [vmem:[%s554 + $0x20] sm:$0xff]
    %v560 = vld [vmem:[%s554 + $0x28] sm:$0xff]
    %v561 = vld [vmem:[%s554 + $0x30] sm:$0xff]
    %v562 = vld [vmem:[%s554 + $0x38] sm:$0xff]
    %v563 = vld [vmem:[%s554 + $0x40] sm:$0xff]
    %v564 = vld [vmem:[%s554 + $0x48] sm:$0xff]
    %v565 = vld [vmem:[%s554 + $0x50] sm:$0xff]
    %v566 = vld [vmem:[%s554 + $0x58] sm:$0xff]
    %v567 = vld [vmem:[%s554 + $0x60] sm:$0xff]
    %v568 = vld [vmem:[%s554 + $0x68] sm:$0xff]
    %v569 = vld [vmem:[%s554 + $0x70] sm:$0xff]
    %v570 = vld [vmem:[%s554 + $0x78] sm:$0xff]
    %v571 = vld [vmem:[%s554 + $0x80] sm:$0xff]
    %v572 = vld [vmem:[%s554 + $0x88] sm:$0xff]
    %v573 = vld [vmem:[%s554 + $0x90] sm:$0xff]
    %v574 = vld [vmem:[%s554 + $0x98] sm:$0xff]
    %v575 = vld [vmem:[%s554 + $0xa0] sm:$0xff]
    %v576 = vld [vmem:[%s554 + $0xa8] sm:$0xff]
    %v577 = vld [vmem:[%s554 + $0xb0] sm:$0xff]
    %v578 = vld [vmem:[%s554 + $0xb8] sm:$0xff]
    %v579 = vld [vmem:[%s554 + $0xc0] sm:$0xff]
    %v580 = vld [vmem:[%s554 + $0xc8] sm:$0xff]
    %v581 = vld [vmem:[%s554 + $0xd0] sm:$0xff]
    %v582 = vld [vmem:[%s554 + $0xd8] sm:$0xff]
    %v583 = vld [vmem:[%s554 + $0xe0] sm:$0xff]
    %v584 = vld [vmem:[%s554 + $0xe8] sm:$0xff]
    %v585 = vld [vmem:[%s554 + $0xf0] sm:$0xff]
    %v586 = vld [vmem:[%s554 + $0xf8] sm:$0xff]
    %587 = vmatpush.msra.mxu0 %v585
    %588 = vmatpush.msra.mxu0 %v583
    %589 = vmatpush.msra.mxu0 %v581
    %590 = vmatpush.msra.mxu0 %v579
    %591 = vmatpush.msra.mxu0 %v577
    %592 = vmatpush.msra.mxu0 %v575
    %593 = vmatpush.msra.mxu0 %v573
    %594 = vmatpush.msra.mxu0 %v571
    %595 = vmatpush.msra.mxu0 %v569
    %596 = vmatpush.msra.mxu0 %v567
    %597 = vmatpush.msra.mxu0 %v565
    %598 = vmatpush.msra.mxu0 %v563
    %599 = vmatpush.msra.mxu0 %v561
    %600 = vmatpush.msra.mxu0 %v559
    %601 = vmatpush.msra.mxu0 %v557
    %602 = vmatpush.msra.mxu0 %v555
    %603 = vmatmul.f32.gmra.mxu0 %v550
    %v604 = vpop.f32.mrf.mxu0
    %v605 = vadd.f32 0.0, %v604
    %606 = vmatmul.f32.gmra.mxu0 %v551
    %v607 = vpop.f32.mrf.mxu0
    %v608 = vadd.f32 0.0, %v607
    %609 = vmatmul.f32.gmra.mxu0 %v552
    %v610 = vpop.f32.mrf.mxu0
    %v611 = vadd.f32 0.0, %v610
    %612 = vmatmul.f32.gmra.mxu0 %v553
    %v613 = vpop.f32.mrf.mxu0
    %v614 = vadd.f32 0.0, %v613
    %615 = vdwg.mxu0
    %616 = vmatpush.msra.mxu0 %v586
    %617 = vmatpush.msra.mxu0 %v584
    %618 = vmatpush.msra.mxu0 %v582
    %619 = vmatpush.msra.mxu0 %v580
    %620 = vmatpush.msra.mxu0 %v578
    %621 = vmatpush.msra.mxu0 %v576
    %622 = vmatpush.msra.mxu0 %v574
    %623 = vmatpush.msra.mxu0 %v572
    %624 = vmatpush.msra.mxu0 %v570
    %625 = vmatpush.msra.mxu0 %v568
    %626 = vmatpush.msra.mxu0 %v566
    %627 = vmatpush.msra.mxu0 %v564
    %628 = vmatpush.msra.mxu0 %v562
    %629 = vmatpush.msra.mxu0 %v560
    %630 = vmatpush.msra.mxu0 %v558
    %631 = vmatpush.msra.mxu0 %v556
    %632 = vmatmul.f32.gmra.mxu0 %v550
    %v633 = vpop.f32.mrf.mxu0
    %v634 = vadd.f32 0.0, %v633
    %635 = vmatmul.f32.gmra.mxu0 %v551
    %v636 = vpop.f32.mrf.mxu0
    %v637 = vadd.f32 0.0, %v636
    %638 = vmatmul.f32.gmra.mxu0 %v552
    %v639 = vpop.f32.mrf.mxu0
    %v640 = vadd.f32 0.0, %v639
    %641 = vmatmul.f32.gmra.mxu0 %v553
    %v642 = vpop.f32.mrf.mxu0
    %v643 = vadd.f32 0.0, %v642
    %644 = vdwg.mxu0
    %v645 = vadd.f32 %v542, %v605
    %v646 = vadd.f32 %v543, %v634
    %v647 = vadd.f32 %v544, %v608
    %v648 = vadd.f32 %v545, %v637
    %v649 = vadd.f32 %v546, %v611
    %v650 = vadd.f32 %v547, %v640
    %v651 = vadd.f32 %v548, %v614
    %v652 = vadd.f32 %v549, %v643
    %v653 = vld [vmem:[#allocation2 + $0x4] sm:$0xff]
    %v654 = vld [vmem:[#allocation2 + $0xc] sm:$0xff]
    %v655 = vld [vmem:[#allocation2 + $0x1c] sm:$0xff]
    %v656 = vld [vmem:[#allocation2 + $0x24] sm:$0xff]
    %s657 = scalar_lea.vmem [#allocation6], 1024
    %v658 = vld [vmem:[%s657] sm:$0xff]
    %v659 = vld [vmem:[%s657 + $0x8] sm:$0xff]
    %v660 = vld [vmem:[%s657 + $0x10] sm:$0xff]
    %v661 = vld [vmem:[%s657 + $0x18] sm:$0xff]
    %v662 = vld [vmem:[%s657 + $0x20] sm:$0xff]
    %v663 = vld [vmem:[%s657 + $0x28] sm:$0xff]
    %v664 = vld [vmem:[%s657 + $0x30] sm:$0xff]
    %v665 = vld [vmem:[%s657 + $0x38] sm:$0xff]
    %v666 = vld [vmem:[%s657 + $0x40] sm:$0xff]
    %v667 = vld [vmem:[%s657 + $0x48] sm:$0xff]
    %v668 = vld [vmem:[%s657 + $0x50] sm:$0xff]
    %v669 = vld [vmem:[%s657 + $0x58] sm:$0xff]
    %v670 = vld [vmem:[%s657 + $0x60] sm:$0xff]
    %v671 = vld [vmem:[%s657 + $0x68] sm:$0xff]
    %v672 = vld [vmem:[%s657 + $0x70] sm:$0xff]
    %v673 = vld [vmem:[%s657 + $0x78] sm:$0xff]
    %v674 = vld [vmem:[%s657 + $0x80] sm:$0xff]
    %v675 = vld [vmem:[%s657 + $0x88] sm:$0xff]
    %v676 = vld [vmem:[%s657 + $0x90] sm:$0xff]
    %v677 = vld [vmem:[%s657 + $0x98] sm:$0xff]
    %v678 = vld [vmem:[%s657 + $0xa0] sm:$0xff]
    %v679 = vld [vmem:[%s657 + $0xa8] sm:$0xff]
    %v680 = vld [vmem:[%s657 + $0xb0] sm:$0xff]
    %v681 = vld [vmem:[%s657 + $0xb8] sm:$0xff]
    %v682 = vld [vmem:[%s657 + $0xc0] sm:$0xff]
    %v683 = vld [vmem:[%s657 + $0xc8] sm:$0xff]
    %v684 = vld [vmem:[%s657 + $0xd0] sm:$0xff]
    %v685 = vld [vmem:[%s657 + $0xd8] sm:$0xff]
    %v686 = vld [vmem:[%s657 + $0xe0] sm:$0xff]
    %v687 = vld [vmem:[%s657 + $0xe8] sm:$0xff]
    %v688 = vld [vmem:[%s657 + $0xf0] sm:$0xff]
    %v689 = vld [vmem:[%s657 + $0xf8] sm:$0xff]
    %690 = vmatpush.msra.mxu0 %v688
    %691 = vmatpush.msra.mxu0 %v686
    %692 = vmatpush.msra.mxu0 %v684
    %693 = vmatpush.msra.mxu0 %v682
    %694 = vmatpush.msra.mxu0 %v680
    %695 = vmatpush.msra.mxu0 %v678
    %696 = vmatpush.msra.mxu0 %v676
    %697 = vmatpush.msra.mxu0 %v674
    %698 = vmatpush.msra.mxu0 %v672
    %699 = vmatpush.msra.mxu0 %v670
    %700 = vmatpush.msra.mxu0 %v668
    %701 = vmatpush.msra.mxu0 %v666
    %702 = vmatpush.msra.mxu0 %v664
    %703 = vmatpush.msra.mxu0 %v662
    %704 = vmatpush.msra.mxu0 %v660
    %705 = vmatpush.msra.mxu0 %v658
    %706 = vmatmul.f32.gmra.mxu0 %v653
    %v707 = vpop.f32.mrf.mxu0
    %v708 = vadd.f32 0.0, %v707
    %709 = vmatmul.f32.gmra.mxu0 %v654
    %v710 = vpop.f32.mrf.mxu0
    %v711 = vadd.f32 0.0, %v710
    %712 = vmatmul.f32.gmra.mxu0 %v655
    %v713 = vpop.f32.mrf.mxu0
    %v714 = vadd.f32 0.0, %v713
    %715 = vmatmul.f32.gmra.mxu0 %v656
    %v716 = vpop.f32.mrf.mxu0
    %v717 = vadd.f32 0.0, %v716
    %718 = vdwg.mxu0
    %719 = vmatpush.msra.mxu0 %v689
    %720 = vmatpush.msra.mxu0 %v687
    %721 = vmatpush.msra.mxu0 %v685
    %722 = vmatpush.msra.mxu0 %v683
    %723 = vmatpush.msra.mxu0 %v681
    %724 = vmatpush.msra.mxu0 %v679
    %725 = vmatpush.msra.mxu0 %v677
    %726 = vmatpush.msra.mxu0 %v675
    %727 = vmatpush.msra.mxu0 %v673
    %728 = vmatpush.msra.mxu0 %v671
    %729 = vmatpush.msra.mxu0 %v669
    %730 = vmatpush.msra.mxu0 %v667
    %731 = vmatpush.msra.mxu0 %v665
    %732 = vmatpush.msra.mxu0 %v663
    %733 = vmatpush.msra.mxu0 %v661
    %734 = vmatpush.msra.mxu0 %v659
    %735 = vmatmul.f32.gmra.mxu0 %v653
    %v736 = vpop.f32.mrf.mxu0
    %v737 = vadd.f32 0.0, %v736
    %738 = vmatmul.f32.gmra.mxu0 %v654
    %v739 = vpop.f32.mrf.mxu0
    %v740 = vadd.f32 0.0, %v739
    %741 = vmatmul.f32.gmra.mxu0 %v655
    %v742 = vpop.f32.mrf.mxu0
    %v743 = vadd.f32 0.0, %v742
    %744 = vmatmul.f32.gmra.mxu0 %v656
    %v745 = vpop.f32.mrf.mxu0
    %v746 = vadd.f32 0.0, %v745
    %747 = vdwg.mxu0
    %v748 = vadd.f32 %v645, %v708
    %v749 = vadd.f32 %v646, %v737
    %v750 = vadd.f32 %v647, %v711
    %v751 = vadd.f32 %v648, %v740
    %v752 = vadd.f32 %v649, %v714
    %v753 = vadd.f32 %v650, %v743
    %v754 = vadd.f32 %v651, %v717
    %v755 = vadd.f32 %v652, %v746
    %v756 = vld [vmem:[#allocation2 + $0x5] sm:$0xff]
    %v757 = vld [vmem:[#allocation2 + $0xd] sm:$0xff]
    %v758 = vld [vmem:[#allocation2 + $0x1d] sm:$0xff]
    %v759 = vld [vmem:[#allocation2 + $0x25] sm:$0xff]
    %s760 = scalar_lea.vmem [#allocation6], 1280
    %v761 = vld [vmem:[%s760] sm:$0xff]
    %v762 = vld [vmem:[%s760 + $0x8] sm:$0xff]
    %v763 = vld [vmem:[%s760 + $0x10] sm:$0xff]
    %v764 = vld [vmem:[%s760 + $0x18] sm:$0xff]
    %v765 = vld [vmem:[%s760 + $0x20] sm:$0xff]
    %v766 = vld [vmem:[%s760 + $0x28] sm:$0xff]
    %v767 = vld [vmem:[%s760 + $0x30] sm:$0xff]
    %v768 = vld [vmem:[%s760 + $0x38] sm:$0xff]
    %v769 = vld [vmem:[%s760 + $0x40] sm:$0xff]
    %v770 = vld [vmem:[%s760 + $0x48] sm:$0xff]
    %v771 = vld [vmem:[%s760 + $0x50] sm:$0xff]
    %v772 = vld [vmem:[%s760 + $0x58] sm:$0xff]
    %v773 = vld [vmem:[%s760 + $0x60] sm:$0xff]
    %v774 = vld [vmem:[%s760 + $0x68] sm:$0xff]
    %v775 = vld [vmem:[%s760 + $0x70] sm:$0xff]
    %v776 = vld [vmem:[%s760 + $0x78] sm:$0xff]
    %v777 = vld [vmem:[%s760 + $0x80] sm:$0xff]
    %v778 = vld [vmem:[%s760 + $0x88] sm:$0xff]
    %v779 = vld [vmem:[%s760 + $0x90] sm:$0xff]
    %v780 = vld [vmem:[%s760 + $0x98] sm:$0xff]
    %v781 = vld [vmem:[%s760 + $0xa0] sm:$0xff]
    %v782 = vld [vmem:[%s760 + $0xa8] sm:$0xff]
    %v783 = vld [vmem:[%s760 + $0xb0] sm:$0xff]
    %v784 = vld [vmem:[%s760 + $0xb8] sm:$0xff]
    %v785 = vld [vmem:[%s760 + $0xc0] sm:$0xff]
    %v786 = vld [vmem:[%s760 + $0xc8] sm:$0xff]
    %v787 = vld [vmem:[%s760 + $0xd0] sm:$0xff]
    %v788 = vld [vmem:[%s760 + $0xd8] sm:$0xff]
    %v789 = vld [vmem:[%s760 + $0xe0] sm:$0xff]
    %v790 = vld [vmem:[%s760 + $0xe8] sm:$0xff]
    %v791 = vld [vmem:[%s760 + $0xf0] sm:$0xff]
    %v792 = vld [vmem:[%s760 + $0xf8] sm:$0xff]
    %793 = vmatpush.msra.mxu0 %v791
    %794 = vmatpush.msra.mxu0 %v789
    %795 = vmatpush.msra.mxu0 %v787
    %796 = vmatpush.msra.mxu0 %v785
    %797 = vmatpush.msra.mxu0 %v783
    %798 = vmatpush.msra.mxu0 %v781
    %799 = vmatpush.msra.mxu0 %v779
    %800 = vmatpush.msra.mxu0 %v777
    %801 = vmatpush.msra.mxu0 %v775
    %802 = vmatpush.msra.mxu0 %v773
    %803 = vmatpush.msra.mxu0 %v771
    %804 = vmatpush.msra.mxu0 %v769
    %805 = vmatpush.msra.mxu0 %v767
    %806 = vmatpush.msra.mxu0 %v765
    %807 = vmatpush.msra.mxu0 %v763
    %808 = vmatpush.msra.mxu0 %v761
    %809 = vmatmul.f32.gmra.mxu0 %v756
    %v810 = vpop.f32.mrf.mxu0
    %v811 = vadd.f32 0.0, %v810
    %812 = vmatmul.f32.gmra.mxu0 %v757
    %v813 = vpop.f32.mrf.mxu0
    %v814 = vadd.f32 0.0, %v813
    %815 = vmatmul.f32.gmra.mxu0 %v758
    %v816 = vpop.f32.mrf.mxu0
    %v817 = vadd.f32 0.0, %v816
    %818 = vmatmul.f32.gmra.mxu0 %v759
    %v819 = vpop.f32.mrf.mxu0
    %v820 = vadd.f32 0.0, %v819
    %821 = vdwg.mxu0
    %822 = vmatpush.msra.mxu0 %v792
    %823 = vmatpush.msra.mxu0 %v790
    %824 = vmatpush.msra.mxu0 %v788
    %825 = vmatpush.msra.mxu0 %v786
    %826 = vmatpush.msra.mxu0 %v784
    %827 = vmatpush.msra.mxu0 %v782
    %828 = vmatpush.msra.mxu0 %v780
    %829 = vmatpush.msra.mxu0 %v778
    %830 = vmatpush.msra.mxu0 %v776
    %831 = vmatpush.msra.mxu0 %v774
    %832 = vmatpush.msra.mxu0 %v772
    %833 = vmatpush.msra.mxu0 %v770
    %834 = vmatpush.msra.mxu0 %v768
    %835 = vmatpush.msra.mxu0 %v766
    %836 = vmatpush.msra.mxu0 %v764
    %837 = vmatpush.msra.mxu0 %v762
    %838 = vmatmul.f32.gmra.mxu0 %v756
    %v839 = vpop.f32.mrf.mxu0
    %v840 = vadd.f32 0.0, %v839
    %841 = vmatmul.f32.gmra.mxu0 %v757
    %v842 = vpop.f32.mrf.mxu0
    %v843 = vadd.f32 0.0, %v842
    %844 = vmatmul.f32.gmra.mxu0 %v758
    %v845 = vpop.f32.mrf.mxu0
    %v846 = vadd.f32 0.0, %v845
    %847 = vmatmul.f32.gmra.mxu0 %v759
    %v848 = vpop.f32.mrf.mxu0
    %v849 = vadd.f32 0.0, %v848
    %850 = vdwg.mxu0
    %v851 = vadd.f32 %v748, %v811
    %v852 = vadd.f32 %v749, %v840
    %v853 = vadd.f32 %v750, %v814
    %v854 = vadd.f32 %v751, %v843
    %v855 = vadd.f32 %v752, %v817
    %v856 = vadd.f32 %v753, %v846
    %v857 = vadd.f32 %v754, %v820
    %v858 = vadd.f32 %v755, %v849
    %v859 = vld [vmem:[#allocation2 + $0x6] sm:$0xff]
    %v860 = vld [vmem:[#allocation2 + $0xe] sm:$0xff]
    %v861 = vld [vmem:[#allocation2 + $0x1e] sm:$0xff]
    %v862 = vld [vmem:[#allocation2 + $0x26] sm:$0xff]
    %s863 = scalar_lea.vmem [#allocation6], 1536
    %v864 = vld [vmem:[%s863] sm:$0xff]
    %v865 = vld [vmem:[%s863 + $0x8] sm:$0xff]
    %v866 = vld [vmem:[%s863 + $0x10] sm:$0xff]
    %v867 = vld [vmem:[%s863 + $0x18] sm:$0xff]
    %v868 = vld [vmem:[%s863 + $0x20] sm:$0xff]
    %v869 = vld [vmem:[%s863 + $0x28] sm:$0xff]
    %v870 = vld [vmem:[%s863 + $0x30] sm:$0xff]
    %v871 = vld [vmem:[%s863 + $0x38] sm:$0xff]
    %v872 = vld [vmem:[%s863 + $0x40] sm:$0xff]
    %v873 = vld [vmem:[%s863 + $0x48] sm:$0xff]
    %v874 = vld [vmem:[%s863 + $0x50] sm:$0xff]
    %v875 = vld [vmem:[%s863 + $0x58] sm:$0xff]
    %v876 = vld [vmem:[%s863 + $0x60] sm:$0xff]
    %v877 = vld [vmem:[%s863 + $0x68] sm:$0xff]
    %v878 = vld [vmem:[%s863 + $0x70] sm:$0xff]
    %v879 = vld [vmem:[%s863 + $0x78] sm:$0xff]
    %v880 = vld [vmem:[%s863 + $0x80] sm:$0xff]
    %v881 = vld [vmem:[%s863 + $0x88] sm:$0xff]
    %v882 = vld [vmem:[%s863 + $0x90] sm:$0xff]
    %v883 = vld [vmem:[%s863 + $0x98] sm:$0xff]
    %v884 = vld [vmem:[%s863 + $0xa0] sm:$0xff]
    %v885 = vld [vmem:[%s863 + $0xa8] sm:$0xff]
    %v886 = vld [vmem:[%s863 + $0xb0] sm:$0xff]
    %v887 = vld [vmem:[%s863 + $0xb8] sm:$0xff]
    %v888 = vld [vmem:[%s863 + $0xc0] sm:$0xff]
    %v889 = vld [vmem:[%s863 + $0xc8] sm:$0xff]
    %v890 = vld [vmem:[%s863 + $0xd0] sm:$0xff]
    %v891 = vld [vmem:[%s863 + $0xd8] sm:$0xff]
    %v892 = vld [vmem:[%s863 + $0xe0] sm:$0xff]
    %v893 = vld [vmem:[%s863 + $0xe8] sm:$0xff]
    %v894 = vld [vmem:[%s863 + $0xf0] sm:$0xff]
    %v895 = vld [vmem:[%s863 + $0xf8] sm:$0xff]
    %896 = vmatpush.msra.mxu0 %v894
    %897 = vmatpush.msra.mxu0 %v892
    %898 = vmatpush.msra.mxu0 %v890
    %899 = vmatpush.msra.mxu0 %v888
    %900 = vmatpush.msra.mxu0 %v886
    %901 = vmatpush.msra.mxu0 %v884
    %902 = vmatpush.msra.mxu0 %v882
    %903 = vmatpush.msra.mxu0 %v880
    %904 = vmatpush.msra.mxu0 %v878
    %905 = vmatpush.msra.mxu0 %v876
    %906 = vmatpush.msra.mxu0 %v874
    %907 = vmatpush.msra.mxu0 %v872
    %908 = vmatpush.msra.mxu0 %v870
    %909 = vmatpush.msra.mxu0 %v868
    %910 = vmatpush.msra.mxu0 %v866
    %911 = vmatpush.msra.mxu0 %v864
    %912 = vmatmul.f32.gmra.mxu0 %v859
    %v913 = vpop.f32.mrf.mxu0
    %v914 = vadd.f32 0.0, %v913
    %915 = vmatmul.f32.gmra.mxu0 %v860
    %v916 = vpop.f32.mrf.mxu0
    %v917 = vadd.f32 0.0, %v916
    %918 = vmatmul.f32.gmra.mxu0 %v861
    %v919 = vpop.f32.mrf.mxu0
    %v920 = vadd.f32 0.0, %v919
    %921 = vmatmul.f32.gmra.mxu0 %v862
    %v922 = vpop.f32.mrf.mxu0
    %v923 = vadd.f32 0.0, %v922
    %924 = vdwg.mxu0
    %925 = vmatpush.msra.mxu0 %v895
    %926 = vmatpush.msra.mxu0 %v893
    %927 = vmatpush.msra.mxu0 %v891
    %928 = vmatpush.msra.mxu0 %v889
    %929 = vmatpush.msra.mxu0 %v887
    %930 = vmatpush.msra.mxu0 %v885
    %931 = vmatpush.msra.mxu0 %v883
    %932 = vmatpush.msra.mxu0 %v881
    %933 = vmatpush.msra.mxu0 %v879
    %934 = vmatpush.msra.mxu0 %v877
    %935 = vmatpush.msra.mxu0 %v875
    %936 = vmatpush.msra.mxu0 %v873
    %937 = vmatpush.msra.mxu0 %v871
    %938 = vmatpush.msra.mxu0 %v869
    %939 = vmatpush.msra.mxu0 %v867
    %940 = vmatpush.msra.mxu0 %v865
    %941 = vmatmul.f32.gmra.mxu0 %v859
    %v942 = vpop.f32.mrf.mxu0
    %v943 = vadd.f32 0.0, %v942
    %944 = vmatmul.f32.gmra.mxu0 %v860
    %v945 = vpop.f32.mrf.mxu0
    %v946 = vadd.f32 0.0, %v945
    %947 = vmatmul.f32.gmra.mxu0 %v861
    %v948 = vpop.f32.mrf.mxu0
    %v949 = vadd.f32 0.0, %v948
    %950 = vmatmul.f32.gmra.mxu0 %v862
    %v951 = vpop.f32.mrf.mxu0
    %v952 = vadd.f32 0.0, %v951
    %953 = vdwg.mxu0
    %v954 = vadd.f32 %v851, %v914
    %v955 = vadd.f32 %v852, %v943
    %v956 = vadd.f32 %v853, %v917
    %v957 = vadd.f32 %v854, %v946
    %v958 = vadd.f32 %v855, %v920
    %v959 = vadd.f32 %v856, %v949
    %v960 = vadd.f32 %v857, %v923
    %v961 = vadd.f32 %v858, %v952
    %v962 = vld [vmem:[#allocation2 + $0x7] sm:$0xff]
    %v963 = vld [vmem:[#allocation2 + $0xf] sm:$0xff]
    %v964 = vld [vmem:[#allocation2 + $0x1f] sm:$0xff]
    %v965 = vld [vmem:[#allocation2 + $0x27] sm:$0xff]
    %s966 = scalar_lea.vmem [#allocation6], 1792
    %v967 = vld [vmem:[%s966] sm:$0xff]
    %v968 = vld [vmem:[%s966 + $0x8] sm:$0xff]
    %v969 = vld [vmem:[%s966 + $0x10] sm:$0xff]
    %v970 = vld [vmem:[%s966 + $0x18] sm:$0xff]
    %v971 = vld [vmem:[%s966 + $0x20] sm:$0xff]
    %v972 = vld [vmem:[%s966 + $0x28] sm:$0xff]
    %v973 = vld [vmem:[%s966 + $0x30] sm:$0xff]
    %v974 = vld [vmem:[%s966 + $0x38] sm:$0xff]
    %v975 = vld [vmem:[%s966 + $0x40] sm:$0xff]
    %v976 = vld [vmem:[%s966 + $0x48] sm:$0xff]
    %v977 = vld [vmem:[%s966 + $0x50] sm:$0xff]
    %v978 = vld [vmem:[%s966 + $0x58] sm:$0xff]
    %v979 = vld [vmem:[%s966 + $0x60] sm:$0xff]
    %v980 = vld [vmem:[%s966 + $0x68] sm:$0xff]
    %v981 = vld [vmem:[%s966 + $0x70] sm:$0xff]
    %v982 = vld [vmem:[%s966 + $0x78] sm:$0xff]
    %v983 = vld [vmem:[%s966 + $0x80] sm:$0xff]
    %v984 = vld [vmem:[%s966 + $0x88] sm:$0xff]
    %v985 = vld [vmem:[%s966 + $0x90] sm:$0xff]
    %v986 = vld [vmem:[%s966 + $0x98] sm:$0xff]
    %v987 = vld [vmem:[%s966 + $0xa0] sm:$0xff]
    %v988 = vld [vmem:[%s966 + $0xa8] sm:$0xff]
    %v989 = vld [vmem:[%s966 + $0xb0] sm:$0xff]
    %v990 = vld [vmem:[%s966 + $0xb8] sm:$0xff]
    %v991 = vld [vmem:[%s966 + $0xc0] sm:$0xff]
    %v992 = vld [vmem:[%s966 + $0xc8] sm:$0xff]
    %v993 = vld [vmem:[%s966 + $0xd0] sm:$0xff]
    %v994 = vld [vmem:[%s966 + $0xd8] sm:$0xff]
    %v995 = vld [vmem:[%s966 + $0xe0] sm:$0xff]
    %v996 = vld [vmem:[%s966 + $0xe8] sm:$0xff]
    %v997 = vld [vmem:[%s966 + $0xf0] sm:$0xff]
    %v998 = vld [vmem:[%s966 + $0xf8] sm:$0xff]
    %999 = vmatpush.msra.mxu0 %v997
    %1000 = vmatpush.msra.mxu0 %v995
    %1001 = vmatpush.msra.mxu0 %v993
    %1002 = vmatpush.msra.mxu0 %v991
    %1003 = vmatpush.msra.mxu0 %v989
    %1004 = vmatpush.msra.mxu0 %v987
    %1005 = vmatpush.msra.mxu0 %v985
    %1006 = vmatpush.msra.mxu0 %v983
    %1007 = vmatpush.msra.mxu0 %v981
    %1008 = vmatpush.msra.mxu0 %v979
    %1009 = vmatpush.msra.mxu0 %v977
    %1010 = vmatpush.msra.mxu0 %v975
    %1011 = vmatpush.msra.mxu0 %v973
    %1012 = vmatpush.msra.mxu0 %v971
    %1013 = vmatpush.msra.mxu0 %v969
    %1014 = vmatpush.msra.mxu0 %v967
    %1015 = vmatmul.f32.gmra.mxu0 %v962
    %v1016 = vpop.f32.mrf.mxu0
    %v1017 = vadd.f32 0.0, %v1016
    %1018 = vmatmul.f32.gmra.mxu0 %v963
    %v1019 = vpop.f32.mrf.mxu0
    %v1020 = vadd.f32 0.0, %v1019
    %1021 = vmatmul.f32.gmra.mxu0 %v964
    %v1022 = vpop.f32.mrf.mxu0
    %v1023 = vadd.f32 0.0, %v1022
    %1024 = vmatmul.f32.gmra.mxu0 %v965
    %v1025 = vpop.f32.mrf.mxu0
    %v1026 = vadd.f32 0.0, %v1025
    %1027 = vdwg.mxu0
    %1028 = vmatpush.msra.mxu0 %v998
    %1029 = vmatpush.msra.mxu0 %v996
    %1030 = vmatpush.msra.mxu0 %v994
    %1031 = vmatpush.msra.mxu0 %v992
    %1032 = vmatpush.msra.mxu0 %v990
    %1033 = vmatpush.msra.mxu0 %v988
    %1034 = vmatpush.msra.mxu0 %v986
    %1035 = vmatpush.msra.mxu0 %v984
    %1036 = vmatpush.msra.mxu0 %v982
    %1037 = vmatpush.msra.mxu0 %v980
    %1038 = vmatpush.msra.mxu0 %v978
    %1039 = vmatpush.msra.mxu0 %v976
    %1040 = vmatpush.msra.mxu0 %v974
    %1041 = vmatpush.msra.mxu0 %v972
    %1042 = vmatpush.msra.mxu0 %v970
    %1043 = vmatpush.msra.mxu0 %v968
    %1044 = vmatmul.f32.gmra.mxu0 %v962
    %v1045 = vpop.f32.mrf.mxu0
    %v1046 = vadd.f32 0.0, %v1045
    %1047 = vmatmul.f32.gmra.mxu0 %v963
    %v1048 = vpop.f32.mrf.mxu0
    %v1049 = vadd.f32 0.0, %v1048
    %1050 = vmatmul.f32.gmra.mxu0 %v964
    %v1051 = vpop.f32.mrf.mxu0
    %v1052 = vadd.f32 0.0, %v1051
    %1053 = vmatmul.f32.gmra.mxu0 %v965
    %v1054 = vpop.f32.mrf.mxu0
    %v1055 = vadd.f32 0.0, %v1054
    %1056 = vdwg.mxu0
    %v1057 = vadd.f32 %v954, %v1017
    %v1058 = vadd.f32 %v955, %v1046
    %v1059 = vadd.f32 %v956, %v1020
    %v1060 = vadd.f32 %v957, %v1049
    %v1061 = vadd.f32 %v958, %v1023
    %v1062 = vadd.f32 %v959, %v1052
    %v1063 = vadd.f32 %v960, %v1026
    %v1064 = vadd.f32 %v961, %v1055
    %v1065 = vld [vmem:[#allocation2 + $0x8] sm:$0xff]
    %v1066 = vld [vmem:[#allocation2 + $0x10] sm:$0xff]
    %v1067 = vld [vmem:[#allocation2 + $0x20] sm:$0xff]
    %v1068 = vld [vmem:[#allocation2 + $0x28] sm:$0xff]
    %s1069 = scalar_lea.vmem [#allocation6], 2048
    %v1070 = vld [vmem:[%s1069] sm:$0xff]
    %v1071 = vld [vmem:[%s1069 + $0x8] sm:$0xff]
    %v1072 = vld [vmem:[%s1069 + $0x10] sm:$0xff]
    %v1073 = vld [vmem:[%s1069 + $0x18] sm:$0xff]
    %v1074 = vld [vmem:[%s1069 + $0x20] sm:$0xff]
    %v1075 = vld [vmem:[%s1069 + $0x28] sm:$0xff]
    %v1076 = vld [vmem:[%s1069 + $0x30] sm:$0xff]
    %v1077 = vld [vmem:[%s1069 + $0x38] sm:$0xff]
    %v1078 = vld [vmem:[%s1069 + $0x40] sm:$0xff]
    %v1079 = vld [vmem:[%s1069 + $0x48] sm:$0xff]
    %v1080 = vld [vmem:[%s1069 + $0x50] sm:$0xff]
    %v1081 = vld [vmem:[%s1069 + $0x58] sm:$0xff]
    %v1082 = vld [vmem:[%s1069 + $0x60] sm:$0xff]
    %v1083 = vld [vmem:[%s1069 + $0x68] sm:$0xff]
    %v1084 = vld [vmem:[%s1069 + $0x70] sm:$0xff]
    %v1085 = vld [vmem:[%s1069 + $0x78] sm:$0xff]
    %v1086 = vld [vmem:[%s1069 + $0x80] sm:$0xff]
    %v1087 = vld [vmem:[%s1069 + $0x88] sm:$0xff]
    %v1088 = vld [vmem:[%s1069 + $0x90] sm:$0xff]
    %v1089 = vld [vmem:[%s1069 + $0x98] sm:$0xff]
    %v1090 = vld [vmem:[%s1069 + $0xa0] sm:$0xff]
    %v1091 = vld [vmem:[%s1069 + $0xa8] sm:$0xff]
    %v1092 = vld [vmem:[%s1069 + $0xb0] sm:$0xff]
    %v1093 = vld [vmem:[%s1069 + $0xb8] sm:$0xff]
    %v1094 = vld [vmem:[%s1069 + $0xc0] sm:$0xff]
    %v1095 = vld [vmem:[%s1069 + $0xc8] sm:$0xff]
    %v1096 = vld [vmem:[%s1069 + $0xd0] sm:$0xff]
    %v1097 = vld [vmem:[%s1069 + $0xd8] sm:$0xff]
    %v1098 = vld [vmem:[%s1069 + $0xe0] sm:$0xff]
    %v1099 = vld [vmem:[%s1069 + $0xe8] sm:$0xff]
    %v1100 = vld [vmem:[%s1069 + $0xf0] sm:$0xff]
    %v1101 = vld [vmem:[%s1069 + $0xf8] sm:$0xff]
    %1102 = vmatpush.msra.mxu0 %v1100
    %1103 = vmatpush.msra.mxu0 %v1098
    %1104 = vmatpush.msra.mxu0 %v1096
    %1105 = vmatpush.msra.mxu0 %v1094
    %1106 = vmatpush.msra.mxu0 %v1092
    %1107 = vmatpush.msra.mxu0 %v1090
    %1108 = vmatpush.msra.mxu0 %v1088
    %1109 = vmatpush.msra.mxu0 %v1086
    %1110 = vmatpush.msra.mxu0 %v1084
    %1111 = vmatpush.msra.mxu0 %v1082
    %1112 = vmatpush.msra.mxu0 %v1080
    %1113 = vmatpush.msra.mxu0 %v1078
    %1114 = vmatpush.msra.mxu0 %v1076
    %1115 = vmatpush.msra.mxu0 %v1074
    %1116 = vmatpush.msra.mxu0 %v1072
    %1117 = vmatpush.msra.mxu0 %v1070
    %1118 = vmatmul.f32.gmra.mxu0 %v1065
    %v1119 = vpop.f32.mrf.mxu0
    %v1120 = vadd.f32 0.0, %v1119
    %1121 = vmatmul.f32.gmra.mxu0 %v1066
    %v1122 = vpop.f32.mrf.mxu0
    %v1123 = vadd.f32 0.0, %v1122
    %1124 = vmatmul.f32.gmra.mxu0 %v1067
    %v1125 = vpop.f32.mrf.mxu0
    %v1126 = vadd.f32 0.0, %v1125
    %1127 = vmatmul.f32.gmra.mxu0 %v1068
    %v1128 = vpop.f32.mrf.mxu0
    %v1129 = vadd.f32 0.0, %v1128
    %1130 = vdwg.mxu0
    %1131 = vmatpush.msra.mxu0 %v1101
    %1132 = vmatpush.msra.mxu0 %v1099
    %1133 = vmatpush.msra.mxu0 %v1097
    %1134 = vmatpush.msra.mxu0 %v1095
    %1135 = vmatpush.msra.mxu0 %v1093
    %1136 = vmatpush.msra.mxu0 %v1091
    %1137 = vmatpush.msra.mxu0 %v1089
    %1138 = vmatpush.msra.mxu0 %v1087
    %1139 = vmatpush.msra.mxu0 %v1085
    %1140 = vmatpush.msra.mxu0 %v1083
    %1141 = vmatpush.msra.mxu0 %v1081
    %1142 = vmatpush.msra.mxu0 %v1079
    %1143 = vmatpush.msra.mxu0 %v1077
    %1144 = vmatpush.msra.mxu0 %v1075
    %1145 = vmatpush.msra.mxu0 %v1073
    %1146 = vmatpush.msra.mxu0 %v1071
    %1147 = vmatmul.f32.gmra.mxu0 %v1065
    %v1148 = vpop.f32.mrf.mxu0
    %v1149 = vadd.f32 0.0, %v1148
    %1150 = vmatmul.f32.gmra.mxu0 %v1066
    %v1151 = vpop.f32.mrf.mxu0
    %v1152 = vadd.f32 0.0, %v1151
    %1153 = vmatmul.f32.gmra.mxu0 %v1067
    %v1154 = vpop.f32.mrf.mxu0
    %v1155 = vadd.f32 0.0, %v1154
    %1156 = vmatmul.f32.gmra.mxu0 %v1068
    %v1157 = vpop.f32.mrf.mxu0
    %v1158 = vadd.f32 0.0, %v1157
    %1159 = vdwg.mxu0
    %v1160 = vadd.f32 %v1057, %v1120
    %v1161 = vadd.f32 %v1058, %v1149
    %v1162 = vadd.f32 %v1059, %v1123
    %v1163 = vadd.f32 %v1060, %v1152
    %v1164 = vadd.f32 %v1061, %v1126
    %v1165 = vadd.f32 %v1062, %v1155
    %v1166 = vadd.f32 %v1063, %v1129
    %v1167 = vadd.f32 %v1064, %v1158
    %v1168 = vmax.f32 %v1161, %v1163
    %v1169 = vrot.slane %v1168, 4
    %v1170 = vmax.f32 %v1168, %v1169
    %v1171 = vrot.slane %v1170, 2
    %v1172 = vmax.f32 %v1170, %v1171
    %v1173 = vrot.slane %v1172, 1
    %v1174 = vmax.f32 %v1172, %v1173
    %v1175 = vmax.f32 %v1165, %v1167
    %v1176 = vrot.slane %v1175, 4
    %v1177 = vmax.f32 %v1175, %v1176
    %v1178 = vrot.slane %v1177, 2
    %v1179 = vmax.f32 %v1177, %v1178
    %v1180 = vrot.slane %v1179, 1
    %v1181 = vmax.f32 %v1179, %v1180
    %v1182 = vsub.f32 %v1161, %v1174
    %v1183 = vsub.f32 %v1163, %v1174
    %v1184 = vsub.f32 %v1165, %v1181
    %v1185 = vsub.f32 %v1167, %v1181
    %v1186 = vmul.f32 %v1182, 1.442695
    %v1187 = vpow.pop %v1186
    %v1188 = vmul.f32 %v1183, 1.442695
    %v1189 = vpow.pop %v1188
    %v1190 = vmul.f32 %v1184, 1.442695
    %v1191 = vpow.pop %v1190
    %v1192 = vmul.f32 %v1185, 1.442695
    %v1193 = vpow.pop %v1192
    %v1194 = vadd.f32 %v1187, %v1189
    %v1195 = vrot.slane %v1194, 4
    %v1196 = vadd.f32 %v1194, %v1195
    %v1197 = vrot.slane %v1196, 2
    %v1198 = vadd.f32 %v1196, %v1197
    %v1199 = vrot.slane %v1198, 1
    %v1200 = vadd.f32 %v1198, %v1199
    %v1201 = vadd.f32 %v1191, %v1193
    %v1202 = vrot.slane %v1201, 4
    %v1203 = vadd.f32 %v1201, %v1202
    %v1204 = vrot.slane %v1203, 2
    %v1205 = vadd.f32 %v1203, %v1204
    %v1206 = vrot.slane %v1205, 1
    %v1207 = vadd.f32 %v1205, %v1206
    %v1208 = vrcp.pop %v1200
    %v1209 = vrcp.pop %v1207
    %v1210 = vmul.f32 %v1187, %v1208
    %v1211 = vmul.f32 %v1189, %v1208
    %v1212 = vmul.f32 %v1191, %v1209
    %v1213 = vmul.f32 %v1193, %v1209
    %v1214 = vmul.f32 %v1160, %v1210
    %v1215 = vmul.f32 %v1162, %v1211
    %v1216 = vmul.f32 %v1164, %v1212
    %v1217 = vmul.f32 %v1166, %v1213
    %v1218 = vadd.f32 %v1214, %v1215
    %v1219 = vrot.slane %v1218, 4
    %v1220 = vadd.f32 %v1218, %v1219
    %v1221 = vrot.slane %v1220, 2
    %v1222 = vadd.f32 %v1220, %v1221
    %v1223 = vrot.slane %v1222, 1
    %v1224 = vadd.f32 %v1222, %v1223
    %v1225 = vadd.f32 %v1216, %v1217
    %v1226 = vrot.slane %v1225, 4
    %v1227 = vadd.f32 %v1225, %v1226
    %v1228 = vrot.slane %v1227, 2
    %v1229 = vadd.f32 %v1227, %v1228
    %v1230 = vrot.slane %v1229, 1
    %v1231 = vadd.f32 %v1229, %v1230
    %v1232 = vmax.f32 %v1160, %v1162
    %v1233 = vrot.slane %v1232, 4
    %v1234 = vmax.f32 %v1232, %v1233
    %v1235 = vrot.slane %v1234, 2
    %v1236 = vmax.f32 %v1234, %v1235
    %v1237 = vrot.slane %v1236, 1
    %v1238 = vmax.f32 %v1236, %v1237
    %v1239 = vmax.f32 %v1164, %v1166
    %v1240 = vrot.slane %v1239, 4
    %v1241 = vmax.f32 %v1239, %v1240
    %v1242 = vrot.slane %v1241, 2
    %v1243 = vmax.f32 %v1241, %v1242
    %v1244 = vrot.slane %v1243, 1
    %v1245 = vmax.f32 %v1243, %v1244
    %vm1248 = vcmask 1041409
    %v1249 = vsel %vm1248, %v1231, %v1224
    %v1253 = vsel %vm1248, %v1245, %v1238
    %v1255 = vld [vmem:[%s3] sm:$0xff]
    %v1256 = vld [vmem:[%s3 + $0x8] sm:$0xff]
    %v1257 = vld [vmem:[%s3 + $0x10] sm:$0xff]
    %v1258 = vld [vmem:[%s3 + $0x18] sm:$0xff]
    %v1259 = vld [vmem:[%s3 + $0x20] sm:$0xff]
    %v1260 = vld [vmem:[%s3 + $0x28] sm:$0xff]
    %v1261 = vld [vmem:[%s3 + $0x30] sm:$0xff]
    %v1262 = vld [vmem:[%s3 + $0x38] sm:$0xff]
    %v1263 = vld [vmem:[%s3 + $0x40] sm:$0xff]
    %v1264 = vld [vmem:[%s3 + $0x48] sm:$0xff]
    %v1265 = vld [vmem:[%s3 + $0x50] sm:$0xff]
    %v1266 = vld [vmem:[%s3 + $0x58] sm:$0xff]
    %v1267 = vld [vmem:[%s3 + $0x60] sm:$0xff]
    %v1268 = vld [vmem:[%s3 + $0x68] sm:$0xff]
    %v1269 = vld [vmem:[%s3 + $0x70] sm:$0xff]
    %v1270 = vld [vmem:[%s3 + $0x78] sm:$0xff]
    %v1271 = vld [vmem:[%s3 + $0x80] sm:$0xff]
    %v1272 = vld [vmem:[%s3 + $0x88] sm:$0xff]
    %v1273 = vld [vmem:[%s3 + $0x90] sm:$0xff]
    %v1274 = vld [vmem:[%s3 + $0x98] sm:$0xff]
    %v1275 = vld [vmem:[%s3 + $0xa0] sm:$0xff]
    %v1276 = vld [vmem:[%s3 + $0xa8] sm:$0xff]
    %v1277 = vld [vmem:[%s3 + $0xb0] sm:$0xff]
    %v1278 = vld [vmem:[%s3 + $0xb8] sm:$0xff]
    %v1279 = vld [vmem:[%s3 + $0xc0] sm:$0xff]
    %v1280 = vld [vmem:[%s3 + $0xc8] sm:$0xff]
    %v1281 = vld [vmem:[%s3 + $0xd0] sm:$0xff]
    %v1282 = vld [vmem:[%s3 + $0xd8] sm:$0xff]
    %v1283 = vld [vmem:[%s3 + $0xe0] sm:$0xff]
    %v1284 = vld [vmem:[%s3 + $0xe8] sm:$0xff]
    %v1285 = vld [vmem:[%s3 + $0xf0] sm:$0xff]
    %v1286 = vld [vmem:[%s3 + $0xf8] sm:$0xff]
    %v1287 = vld [vmem:[#allocation9] sm:$0x1]
    %v1289 = vperm.slane %v1287, 0
    %1291 = vmatpush.msra.mxu0 %v1270
    %1292 = vmatpush.msra.mxu0 %v1269
    %1293 = vmatpush.msra.mxu0 %v1268
    %1294 = vmatpush.msra.mxu0 %v1267
    %1295 = vmatpush.msra.mxu0 %v1266
    %1296 = vmatpush.msra.mxu0 %v1265
    %1297 = vmatpush.msra.mxu0 %v1264
    %1298 = vmatpush.msra.mxu0 %v1263
    %1299 = vmatpush.msra.mxu0 %v1262
    %1300 = vmatpush.msra.mxu0 %v1261
    %1301 = vmatpush.msra.mxu0 %v1260
    %1302 = vmatpush.msra.mxu0 %v1259
    %1303 = vmatpush.msra.mxu0 %v1258
    %1304 = vmatpush.msra.mxu0 %v1257
    %1305 = vmatpush.msra.mxu0 %v1256
    %1306 = vmatpush.msra.mxu0 %v1255
    %1307 = vmatmul.f32.gmra.mxu0 %v1249
    %v1308 = vpop.f32.mrf.mxu0
    %v1309 = vadd.f32 %v1289, %v1308
    %1310 = vdwg.mxu0
    %1311 = vmatpush.msra.mxu0 %v1286
    %1312 = vmatpush.msra.mxu0 %v1285
    %1313 = vmatpush.msra.mxu0 %v1284
    %1314 = vmatpush.msra.mxu0 %v1283
    %1315 = vmatpush.msra.mxu0 %v1282
    %1316 = vmatpush.msra.mxu0 %v1281
    %1317 = vmatpush.msra.mxu0 %v1280
    %1318 = vmatpush.msra.mxu0 %v1279
    %1319 = vmatpush.msra.mxu0 %v1278
    %1320 = vmatpush.msra.mxu0 %v1277
    %1321 = vmatpush.msra.mxu0 %v1276
    %1322 = vmatpush.msra.mxu0 %v1275
    %1323 = vmatpush.msra.mxu0 %v1274
    %1324 = vmatpush.msra.mxu0 %v1273
    %1325 = vmatpush.msra.mxu0 %v1272
    %1326 = vmatpush.msra.mxu0 %v1271
    %1327 = vmatmul.f32.gmra.mxu0 %v1253
    %v1328 = vpop.f32.mrf.mxu0
    %v1329 = vadd.f32 %v1309, %v1328
    %1330 = vdwg.mxu0
    %v1331 = vmax.f32 %v1329, 0.0
    %v1332 = vld [vmem:[#allocation11] sm:$0x1]
    %v1334 = vperm.slane %v1332, 0
    %v1336 = vmul.f32 %v1331, %v1334
    %v1337 = vld [vmem:[#allocation12] sm:$0x1]
    %v1339 = vperm.slane %v1337, 0
    %v1341 = vadd.f32 %v1336, %v1339
    %v1342 = vld [vmem:[#allocation14] sm:$0xff]
    %v1343 = vld [vmem:[#allocation14 + $0x8] sm:$0xff]
    %v1344 = vld [vmem:[#allocation14 + $0x10] sm:$0xff]
    %v1345 = vld [vmem:[#allocation14 + $0x18] sm:$0xff]
    %v1346 = vld [vmem:[#allocation15] sm:$0x1]
    %v1348 = vperm.slane %v1346, 0
    %vm1350 = vcmask 261120
    %v1352 = vsel %vm1350, %v1341, 0
    %1354 = vmatpush.msra.mxu0 0.0
    %1355 = vmatpush.msra.mxu0 0.0
    %1356 = vmatpush.msra.mxu0 0.0
    %1357 = vmatpush.msra.mxu0 0.0
    %1358 = vmatpush.msra.mxu0 0.0
    %1359 = vmatpush.msra.mxu0 0.0
    %1360 = vmatpush.msra.mxu0 0.0
    %1361 = vmatpush.msra.mxu0 0.0
    %1362 = vmatpush.msra.mxu0 0.0
    %1363 = vmatpush.msra.mxu0 0.0
    %1364 = vmatpush.msra.mxu0 0.0
    %1365 = vmatpush.msra.mxu0 0.0
    %1366 = vmatpush.msra.mxu0 %v1345
    %1367 = vmatpush.msra.mxu0 %v1344
    %1368 = vmatpush.msra.mxu0 %v1343
    %1369 = vmatpush.msra.mxu0 %v1342
    %1370 = vmatmul.f32.gmra.mxu0 %v1352
    %v1371 = vpop.f32.mrf.mxu0
    %v1372 = vadd.f32 %v1348, %v1371
    %1373 = vdwg.mxu0
    %v1374 = vld [vmem:[#allocation17] sm:$0xff]
    %v1375 = vld [vmem:[#allocation17 + $0x8] sm:$0xff]
    %v1376 = vld [vmem:[#allocation17 + $0x10] sm:$0xff]
    %v1377 = vld [vmem:[#allocation17 + $0x18] sm:$0xff]
    %v1378 = vld [vmem:[#allocation17 + $0x20] sm:$0xff]
    %v1379 = vld [vmem:[#allocation17 + $0x28] sm:$0xff]
    %v1380 = vld [vmem:[#allocation17 + $0x30] sm:$0xff]
    %v1381 = vld [vmem:[#allocation17 + $0x38] sm:$0xff]
    %v1382 = vld [vmem:[#allocation17 + $0x40] sm:$0xff]
    %v1383 = vld [vmem:[#allocation17 + $0x48] sm:$0xff]
    %v1384 = vld [vmem:[#allocation17 + $0x50] sm:$0xff]
    %v1385 = vld [vmem:[#allocation17 + $0x58] sm:$0xff]
    %v1386 = vld [vmem:[#allocation17 + $0x60] sm:$0xff]
    %v1387 = vld [vmem:[#allocation17 + $0x68] sm:$0xff]
    %v1388 = vld [vmem:[#allocation17 + $0x70] sm:$0xff]
    %v1389 = vld [vmem:[#allocation17 + $0x78] sm:$0xff]
    %v1390 = vld [vmem:[#allocation18] sm:$0x1]
    %v1392 = vperm.slane %v1390, 0
    %1394 = vmatpush.msra.mxu0 %v1389
    %1395 = vmatpush.msra.mxu0 %v1388
    %1396 = vmatpush.msra.mxu0 %v1387
    %1397 = vmatpush.msra.mxu0 %v1386
    %1398 = vmatpush.msra.mxu0 %v1385
    %1399 = vmatpush.msra.mxu0 %v1384
    %1400 = vmatpush.msra.mxu0 %v1383
    %1401 = vmatpush.msra.mxu0 %v1382
    %1402 = vmatpush.msra.mxu0 %v1381
    %1403 = vmatpush.msra.mxu0 %v1380
    %1404 = vmatpush.msra.mxu0 %v1379
    %1405 = vmatpush.msra.mxu0 %v1378
    %1406 = vmatpush.msra.mxu0 %v1377
    %1407 = vmatpush.msra.mxu0 %v1376
    %1408 = vmatpush.msra.mxu0 %v1375
    %1409 = vmatpush.msra.mxu0 %v1374
    %1410 = vmatmul.f32.gmra.mxu0 %v1372
    %v1411 = vpop.f32.mrf.mxu0
    %v1412 = vadd.f32 %v1392, %v1411
    %1413 = vdwg.mxu0
    %vm1414 = vcmp.gt.f32.partialorder %v1412, 0.0
    %v1415 = vmul.f32 %v1412, 0.1
    %v1416 = vsel %vm1414, %v1412, %v1415
    %v1417 = vld [vmem:[%s11] sm:$0xff]
    %v1418 = vld [vmem:[%s11 + $0x8] sm:$0xff]
    %v1419 = vld [vmem:[%s11 + $0x10] sm:$0xff]
    %v1420 = vld [vmem:[%s11 + $0x18] sm:$0xff]
    %v1421 = vld [vmem:[%s11 + $0x20] sm:$0xff]
    %v1422 = vld [vmem:[%s11 + $0x28] sm:$0xff]
    %v1423 = vld [vmem:[%s11 + $0x30] sm:$0xff]
    %v1424 = vld [vmem:[%s11 + $0x38] sm:$0xff]
    %v1425 = vld [vmem:[%s11 + $0x40] sm:$0xff]
    %v1426 = vld [vmem:[%s11 + $0x48] sm:$0xff]
    %v1427 = vld [vmem:[%s11 + $0x50] sm:$0xff]
    %v1428 = vld [vmem:[%s11 + $0x58] sm:$0xff]
    %v1429 = vld [vmem:[%s11 + $0x60] sm:$0xff]
    %v1430 = vld [vmem:[%s11 + $0x68] sm:$0xff]
    %v1431 = vld [vmem:[%s11 + $0x70] sm:$0xff]
    %v1432 = vld [vmem:[%s11 + $0x78] sm:$0xff]
    %v1433 = vld [vmem:[#allocation20] sm:$0x1]
    %v1435 = vperm.slane %v1433, 0
    %1437 = vmatpush.msra.mxu0 %v1432
    %1438 = vmatpush.msra.mxu0 %v1431
    %1439 = vmatpush.msra.mxu0 %v1430
    %1440 = vmatpush.msra.mxu0 %v1429
    %1441 = vmatpush.msra.mxu0 %v1428
    %1442 = vmatpush.msra.mxu0 %v1427
    %1443 = vmatpush.msra.mxu0 %v1426
    %1444 = vmatpush.msra.mxu0 %v1425
    %1445 = vmatpush.msra.mxu0 %v1424
    %1446 = vmatpush.msra.mxu0 %v1423
    %1447 = vmatpush.msra.mxu0 %v1422
    %1448 = vmatpush.msra.mxu0 %v1421
    %1449 = vmatpush.msra.mxu0 %v1420
    %1450 = vmatpush.msra.mxu0 %v1419
    %1451 = vmatpush.msra.mxu0 %v1418
    %1452 = vmatpush.msra.mxu0 %v1417
    %1453 = vmatmul.f32.gmra.mxu0 %v1416
    %v1454 = vpop.f32.mrf.mxu0
    %v1455 = vadd.f32 %v1435, %v1454
    %1456 = vdwg.mxu0
    %vm1457 = vcmp.gt.f32.partialorder %v1455, 0.0
    %v1458 = vmul.f32 %v1455, 0.1
    %v1459 = vsel %vm1457, %v1455, %v1458
    %v1460 = vld [vmem:[%s13] sm:$0xff]
    %v1461 = vld [vmem:[%s13 + $0x8] sm:$0xff]
    %v1462 = vld [vmem:[%s13 + $0x10] sm:$0xff]
    %v1463 = vld [vmem:[%s13 + $0x18] sm:$0xff]
    %v1464 = vld [vmem:[%s13 + $0x20] sm:$0xff]
    %v1465 = vld [vmem:[%s13 + $0x28] sm:$0xff]
    %v1466 = vld [vmem:[%s13 + $0x30] sm:$0xff]
    %v1467 = vld [vmem:[%s13 + $0x38] sm:$0xff]
    %v1468 = vld [vmem:[#allocation21] sm:$0x1]
    %v1470 = vperm.slane %v1468, 0
    %vm1472 = vcmask 523264
    %v1474 = vsel %vm1472, %v1459, 0
    %1476 = vmatpush.msra.mxu0 0.0
    %1477 = vmatpush.msra.mxu0 0.0
    %1478 = vmatpush.msra.mxu0 0.0
    %1479 = vmatpush.msra.mxu0 0.0
    %1480 = vmatpush.msra.mxu0 0.0
    %1481 = vmatpush.msra.mxu0 0.0
    %1482 = vmatpush.msra.mxu0 0.0
    %1483 = vmatpush.msra.mxu0 0.0
    %1484 = vmatpush.msra.mxu0 %v1467
    %1485 = vmatpush.msra.mxu0 %v1466
    %1486 = vmatpush.msra.mxu0 %v1465
    %1487 = vmatpush.msra.mxu0 %v1464
    %1488 = vmatpush.msra.mxu0 %v1463
    %1489 = vmatpush.msra.mxu0 %v1462
    %1490 = vmatpush.msra.mxu0 %v1461
    %1491 = vmatpush.msra.mxu0 %v1460
    %1492 = vmatmul.f32.gmra.mxu0 %v1474
    %v1493 = vpop.f32.mrf.mxu0
    %v1494 = vadd.f32 %v1470, %v1493
    %1495 = vdwg.mxu0
    %vm1496 = vcmask 9216
    %1497 = vst.msk [vmem:[#allocation23] sm:$0x3] %vm1496, %v1494
    // Predicated region
    $region110: #{la_mlp_pred_forward_impl.1} parent=1 // pred_check
      _
    $region111: #{la_mlp_pred_forward_impl.1} parent=1 // pred_check_branch
      %1499 = sbr.rel (0) target = $region113
    $region112: #{la_mlp_pred_forward_impl.1} parent=1 // pred_region
      %1501 = vsyncadd [#allocation5], 0
      %s1503 = sshll.u32 [#allocation23], 4
      %s1504 = int_to_ptr.vmem [resolvable:$true] %s1503
      %s1505 = sshll.u32 %s15, 4
      %s1506 = int_to_ptr.hbm [resolvable:$true] %s1505
      %1508 = dma.vmem_to_hbm [thread:$0]  %s1504, 32, %s1506, [#allocation5]
    $region113: #{la_mlp_pred_forward_impl.1} parent=1 // pred_fallthru
      _
    // Predicated region
    $region114: #{la_mlp_pred_forward_impl.1} parent=1 // pred_check
      _
    $region115: #{la_mlp_pred_forward_impl.1} parent=1 // pred_check_branch
      %1510 = sbr.rel (0) target = $region117
    $region116: #{la_mlp_pred_forward_impl.1} parent=1 // pred_region
      %1512 = dma.done [#allocation5], 32
    $region117: #{la_mlp_pred_forward_impl.1} parent=1 // pred_fallthru
      _
    %1513 = vsyncpa [#allocation4], 1
    %1514 = vsyncpa [#allocation7], 1
    %1515 = vsyncpa [#allocation10], 1
    %1516 = vsyncpa [#allocation13], 1
    %1517 = vsyncpa [#allocation16], 1
    %1518 = vsyncpa [#allocation19], 1
    %1519 = vsyncpa [#allocation22], 1
    %1520 = vsyncpa [#allocation5], 1

</llo_original>
